<compile_context>
chip_gen: v7x
topology: tpu7x:2x2x1
jax: 0.10.0
libtpu: 0.0.40
codegen_flags: <defaults>
</compile_context>

<pallas_src>
import jax
import jax.numpy as jnp
from jax import lax
from jax.experimental import pallas as pl
from jax.experimental.pallas import tpu as pltpu

_LN_EPS = 1e-5  # torch nn.LayerNorm default eps


def _round_up(x, m):
    return ((x + m - 1) // m) * m


def _build_mlp_kernel(num_layers):
    """Kernel over one (TM, D0p) row tile; statically unrolled over layers."""

    def kernel(*refs):
        x_ref = refs[0]
        o_ref = refs[-1]
        p = refs[1:-1]  # per layer: w_t, b, and (gamma, beta) for non-last layers

        h = x_ref[...]
        idx = 0
        for i in range(num_layers):
            w_ref, b_ref = p[idx], p[idx + 1]
            idx += 2
            # nn.Linear: x @ W^T + b.  W^T is pre-transposed / pre-cast on the
            # host; MXU operands in the weight dtype, f32 accumulation.
            lhs = h if h.dtype == w_ref.dtype else h.astype(w_ref.dtype)
            h = jnp.dot(lhs, w_ref[...], preferred_element_type=jnp.float32)
            h = h + b_ref[...]  # f32 elementwise (VPU); keep f32 on v5e too
            if i != num_layers - 1:
                # TODO(synk): nn.Dropout train-mode stochastic masking not
                # implemented; inference (eval) forward -> identity.
                h = jnp.maximum(h, 0.0)  # nn.ReLU
                g_ref, be_ref = p[idx], p[idx + 1]
                idx += 2
                # nn.LayerNorm over the feature axis (f32 stats, rsqrt on EUP).
                mu = jnp.mean(h, axis=-1, keepdims=True)
                c = h - mu
                var = jnp.mean(c * c, axis=-1, keepdims=True)
                h = c * lax.rsqrt(var + _LN_EPS) * g_ref[...] + be_ref[...]
        o_ref[...] = h.astype(o_ref.dtype)

    return kernel


def mlp_forward(h, params, *, block_rows=512, single_buffer_weights=True):
    """h: (..., input_dim).  params: packed dict from pack_mlp_params."""
    layers = params["layers"]
    dims = params["dims"]
    D0, DL = dims[0], dims[-1]
    D0p, DLp = params["d0_padded"], params["dl_padded"]
    compute_dtype = params["compute_dtype"]
    num_layers = len(layers)
    c_item = jnp.dtype(compute_dtype).itemsize

    lead = h.shape[:-1]
    x = h.reshape(-1, D0).astype(compute_dtype)  # single cast, no f32 round-trip
    R = x.shape[0]
    if D0p != D0:
        x = jnp.pad(x, ((0, 0), (0, D0p - D0)))  # lane-pad contracted dim

    # Row tile: multiple of 8 (sublane grain), >= 2 grid steps so both v7x
    # TensorCores get work under "parallel", and minimal padded-row waste.
    tm = min(block_rows, max(8, _round_up(pl.cdiv(R, 2), 8)))
    Rp = pl.cdiv(R, tm) * tm
    if Rp != R:
        x = jnp.pad(x, ((0, Rp - R), (0, 0)))  # padded rows computed & discarded
    grid = (Rp // tm,)

    # Grid-invariant (VMEM-resident) operands + cost bookkeeping.
    const_args = []
    flops = 0
    weight_bytes = 0
    for layer in layers:
        w, b = layer["w_t"], layer["b"]
        const_args += [w, b]
        flops += 2 * Rp * w.shape[0] * w.shape[1]
        weight_bytes += int(w.size) * w.dtype.itemsize + int(b.size) * b.dtype.itemsize
        if "gamma" in layer:
            g, be = layer["gamma"], layer["beta"]
            const_args += [g, be]
            weight_bytes += int(g.size) * g.dtype.itemsize + int(be.size) * be.dtype.itemsize

    # Explicit scoped-VMEM budget: resident weights (x buffer factor) +
    # double-buffered input/output row tiles + f32 intermediate headroom.
    buf_factor = 1 if single_buffer_weights else 2
    max_dim = max(max(dims), D0p, DLp)
    vmem_needed = (weight_bytes * buf_factor
                   + 2 * tm * (D0p * c_item + DLp * 4)
                   + 4 * tm * max_dim * 4)
    vmem_limit = int(min(max(vmem_needed, 32 << 20), 64 << 20))  # legal on v5e/v6e/v7x

    cost = pl.CostEstimate(
        flops=int(flops),
        transcendentals=int(Rp * max(num_layers - 1, 0)),
        bytes_accessed=int(weight_bytes + Rp * D0p * c_item + Rp * DLp * 4),
    )

    def run(buffered_weights):
        def const_spec(shape):
            if buffered_weights:
                # Weights never change across grid steps -> single buffer halves
                # their VMEM residency (matters most on v7x's 64 MiB / TC).
                return pl.BlockSpec(shape, lambda r: (0, 0),
                                    pipeline_mode=pl.Buffered(1))
            return pl.BlockSpec(shape, lambda r: (0, 0))

        in_specs = [pl.BlockSpec((tm, D0p), lambda r: (r, 0))]
        in_specs += [const_spec(a.shape) for a in const_args]

        out = pl.pallas_call(
            _build_mlp_kernel(num_layers),
            out_shape=jax.ShapeDtypeStruct((Rp, DLp), jnp.float32),
            grid_spec=pltpu.PrefetchScalarGridSpec(
                num_scalar_prefetch=0,
                grid=grid,
                in_specs=in_specs,
                out_specs=pl.BlockSpec((tm, DLp), lambda r: (r, 0)),
            ),
            compiler_params=pltpu.CompilerParams(
                dimension_semantics=("parallel",),
                vmem_limit_bytes=vmem_limit),
            cost_estimate=cost,
        )(x, *const_args)
        return jax.block_until_ready(out)

    if single_buffer_weights:
        try:
            out = run(True)
        except Exception:
            # pl.Buffered(1) unsupported on this jax/libtpu -> default buffering.
            out = run(False)
    else:
        out = run(False)

    out = out[:R, :DL]
    return out.reshape(lead + (DL,))


def init_mlp_params(key, input_dim, hidden_size_list, output_dim):
    """torch-default-init weights (nn.Linear / nn.LayerNorm), f32, torch layout."""
    dims = [input_dim] + list(hidden_size_list) + [output_dim]
    n = len(dims) - 1
    keys = jax.random.split(key, 4 * n)
    raw = []
    for i in range(n):
        fan_in, fan_out = dims[i], dims[i + 1]
        lim = (1.0 / fan_in) ** 0.5  # torch nn.Linear default init bound
        w = jax.random.uniform(keys[4 * i], (fan_out, fan_in),
                               minval=-lim, maxval=lim, dtype=jnp.float32)
        b = jax.random.uniform(keys[4 * i + 1], (fan_out,),
                               minval=-lim, maxval=lim, dtype=jnp.float32)
        layer = dict(w=w, b=b)
        if i != n - 1:
            # torch default gamma=1 / beta=0; perturb so the LN affine path is
            # actually exercised by the correctness check.
            layer["gamma"] = (1.0 + 0.1 * jax.random.normal(
                keys[4 * i + 2], (fan_out,))).astype(jnp.float32)
            layer["beta"] = (0.1 * jax.random.normal(
                keys[4 * i + 3], (fan_out,))).astype(jnp.float32)
        raw.append(layer)
    return raw, dims


def pack_mlp_params(raw_layers, dims, *, compute_dtype=jnp.bfloat16):
    """One-time host prep: transpose, lane-pad D0/DL to 128, cast matmul weights."""
    n = len(raw_layers)
    D0, DL = dims[0], dims[-1]
    D0p, DLp = _round_up(D0, 128), _round_up(DL, 128)
    layers = []
    for i, layer in enumerate(raw_layers):
        w_t = jnp.asarray(layer["w"], jnp.float32).T          # (fan_in, fan_out)
        b = jnp.asarray(layer["b"], jnp.float32).reshape(1, -1)
        if i == 0 and D0p != D0:         # zero-pad contracted dim of first layer
            w_t = jnp.pad(w_t, ((0, D0p - D0), (0, 0)))
        if i == n - 1 and DLp != DL:     # zero-pad output dim (lane-dense stores)
            w_t = jnp.pad(w_t, ((0, 0), (0, DLp - DL)))
            b = jnp.pad(b, ((0, 0), (0, DLp - DL)))
        packed = dict(w_t=w_t.astype(compute_dtype), b=b)     # bias stays f32
        if "gamma" in layer:
            packed["gamma"] = jnp.asarray(layer["gamma"], jnp.float32).reshape(1, -1)
            packed["beta"] = jnp.asarray(layer["beta"], jnp.float32).reshape(1, -1)
        layers.append(packed)
    return dict(layers=layers, dims=list(dims), d0_padded=D0p, dl_padded=DLp,
                compute_dtype=jnp.dtype(compute_dtype))


def mlp_reference(h, raw_layers):
    """Pure-JAX mirror of MLP.forward in eval mode (dropout = identity)."""
    x = h
    n = len(raw_layers)
    for i, layer in enumerate(raw_layers):
        x = x @ layer["w"].T + layer["b"]
        if i != n - 1:
            x = jax.nn.relu(x)
            mu = jnp.mean(x, axis=-1, keepdims=True)
            var = jnp.mean((x - mu) ** 2, axis=-1, keepdims=True)
            x = (x - mu) * lax.rsqrt(var + _LN_EPS) * layer["gamma"] + layer["beta"]
    return x


if __name__ == "__main__":
    # MLP(hideen_size_list=[64, 64], input_dim=32, output_dim=32, dropout=0.1)
    B, S = 2, 8
    input_dim, hidden_size_list, output_dim = 32, [64, 64], 32

    key = jax.random.PRNGKey(0)
    kh, kp = jax.random.split(key)
    h = jax.random.normal(kh, (B, S, input_dim), dtype=jnp.float32)
    raw_layers, dims = init_mlp_params(kp, input_dim, hidden_size_list, output_dim)
    ref = mlp_reference(h, raw_layers)

    # f32 matmul path: tight check of the fused-kernel semantics.
    params_f32 = pack_mlp_params(raw_layers, dims, compute_dtype=jnp.float32)
    out_f32 = jax.block_until_ready(mlp_forward(h, params_f32))
    assert out_f32.shape == (B, S, output_dim)
    assert jnp.allclose(out_f32, ref, atol=1e-4, rtol=1e-4), "f32 mismatch vs reference"

    # bf16 matmul operands (production default): f32 accumulation + f32 LN math,
    # so only operand-quantization drift vs the f32 reference is expected.
    params_bf16 = pack_mlp_params(raw_layers, dims, compute_dtype=jnp.bfloat16)
    out_bf16 = jax.block_until_ready(mlp_forward(h, params_bf16))
    assert out_bf16.shape == (B, S, output_dim)
    assert jnp.allclose(out_bf16, ref, atol=5e-2, rtol=5e-2), "bf16 mismatch vs reference"

    print("KERNEL_OK")
</pallas_src>

<mosaic_0001>
module attributes {stable_mosaic.version = 11 : i64} {
  func.func @kernel(%arg0: i32, %arg1: memref<8x128xf32, #tpu.memory_space<vmem>>, %arg2: memref<128x64xf32, #tpu.memory_space<vmem>>, %arg3: memref<1x64xf32, #tpu.memory_space<vmem>>, %arg4: memref<1x64xf32, #tpu.memory_space<vmem>>, %arg5: memref<1x64xf32, #tpu.memory_space<vmem>>, %arg6: memref<64x64xf32, #tpu.memory_space<vmem>>, %arg7: memref<1x64xf32, #tpu.memory_space<vmem>>, %arg8: memref<1x64xf32, #tpu.memory_space<vmem>>, %arg9: memref<1x64xf32, #tpu.memory_space<vmem>>, %arg10: memref<64x128xf32, #tpu.memory_space<vmem>>, %arg11: memref<1x128xf32, #tpu.memory_space<vmem>>, %arg12: memref<8x128xf32, #tpu.memory_space<vmem>>) attributes {dimension_semantics = [#tpu.dimension_semantics<parallel>], iteration_bounds = array<i64: 2>, scalar_prefetch = 0 : i64, scratch_operands = 0 : i64, tpu.core_type = #tpu.core_type<tc>, window_params = [{transform_indices = @transform_0, window_bounds = array<i64: 8, 128>}, {pipeline_mode = #tpu.pipeline_mode<synchronous>, transform_indices = @transform_1, window_bounds = array<i64: 128, 64>}, {pipeline_mode = #tpu.pipeline_mode<synchronous>, transform_indices = @transform_2, window_bounds = array<i64: 1, 64>}, {pipeline_mode = #tpu.pipeline_mode<synchronous>, transform_indices = @transform_3, window_bounds = array<i64: 1, 64>}, {pipeline_mode = #tpu.pipeline_mode<synchronous>, transform_indices = @transform_4, window_bounds = array<i64: 1, 64>}, {pipeline_mode = #tpu.pipeline_mode<synchronous>, transform_indices = @transform_5, window_bounds = array<i64: 64, 64>}, {pipeline_mode = #tpu.pipeline_mode<synchronous>, transform_indices = @transform_6, window_bounds = array<i64: 1, 64>}, {pipeline_mode = #tpu.pipeline_mode<synchronous>, transform_indices = @transform_7, window_bounds = array<i64: 1, 64>}, {pipeline_mode = #tpu.pipeline_mode<synchronous>, transform_indices = @transform_8, window_bounds = array<i64: 1, 64>}, {pipeline_mode = #tpu.pipeline_mode<synchronous>, transform_indices = @transform_9, window_bounds = array<i64: 64, 128>}, {pipeline_mode = #tpu.pipeline_mode<synchronous>, transform_indices = @transform_10, window_bounds = array<i64: 1, 128>}, {transform_indices = @transform_11, window_bounds = array<i64: 8, 128>}]} {
    %c0 = arith.constant 0 : index
    %c0_0 = arith.constant 0 : index
    %0 = vector.load %arg1[%c0, %c0_0] : memref<8x128xf32, #tpu.memory_space<vmem>>, vector<8x128xf32>
    %c0_1 = arith.constant 0 : index
    %c0_2 = arith.constant 0 : index
    %1 = vector.load %arg2[%c0_1, %c0_2] : memref<128x64xf32, #tpu.memory_space<vmem>>, vector<128x64xf32>
    %cst = arith.constant dense<0.000000e+00> : vector<8x64xf32>
    %2 = tpu.matmul %0, %1, %cst {dimension_numbers = #tpu.dot_dimension_numbers<[1], [0], [0], [1], [0, 0, 1, 1], [], []>} : vector<8x128xf32>, vector<128x64xf32>, vector<8x64xf32> -> vector<8x64xf32>
    %c0_3 = arith.constant 0 : index
    %c0_4 = arith.constant 0 : index
    %3 = vector.load %arg3[%c0_3, %c0_4] : memref<1x64xf32, #tpu.memory_space<vmem>>, vector<1x64xf32>
    %4 = vector.broadcast %3 : vector<1x64xf32> to vector<8x64xf32>
    %5 = arith.addf %2, %4 : vector<8x64xf32>
    %cst_5 = arith.constant 0.000000e+00 : f32
    %6 = vector.broadcast %cst_5 : f32 to vector<8x64xf32>
    %7 = arith.maximumf %5, %6 : vector<8x64xf32>
    %cst_6 = arith.constant dense<0.000000e+00> : vector<8xf32>
    %8 = vector.multi_reduction <add>, %7, %cst_6 [1] : vector<8x64xf32> to vector<8xf32>
    %9 = vector.shape_cast %8 : vector<8xf32> to vector<8x1xf32>
    %cst_7 = arith.constant 6.400000e+01 : f32
    %10 = vector.broadcast %cst_7 : f32 to vector<8x1xf32>
    %11 = arith.divf %9, %10 : vector<8x1xf32>
    %12 = vector.broadcast %11 : vector<8x1xf32> to vector<8x64xf32>
    %13 = arith.subf %7, %12 : vector<8x64xf32>
    %14 = arith.mulf %13, %13 : vector<8x64xf32>
    %cst_8 = arith.constant dense<0.000000e+00> : vector<8xf32>
    %15 = vector.multi_reduction <add>, %14, %cst_8 [1] : vector<8x64xf32> to vector<8xf32>
    %16 = vector.shape_cast %15 : vector<8xf32> to vector<8x1xf32>
    %cst_9 = arith.constant 6.400000e+01 : f32
    %17 = vector.broadcast %cst_9 : f32 to vector<8x1xf32>
    %18 = arith.divf %16, %17 : vector<8x1xf32>
    %cst_10 = arith.constant 9.99999974E-6 : f32
    %19 = vector.broadcast %cst_10 : f32 to vector<8x1xf32>
    %20 = arith.addf %18, %19 : vector<8x1xf32>
    %21 = math.rsqrt %20 : vector<8x1xf32>
    %22 = vector.broadcast %21 : vector<8x1xf32> to vector<8x64xf32>
    %23 = arith.mulf %13, %22 : vector<8x64xf32>
    %c0_11 = arith.constant 0 : index
    %c0_12 = arith.constant 0 : index
    %24 = vector.load %arg4[%c0_11, %c0_12] : memref<1x64xf32, #tpu.memory_space<vmem>>, vector<1x64xf32>
    %25 = vector.broadcast %24 : vector<1x64xf32> to vector<8x64xf32>
    %26 = arith.mulf %23, %25 : vector<8x64xf32>
    %c0_13 = arith.constant 0 : index
    %c0_14 = arith.constant 0 : index
    %27 = vector.load %arg5[%c0_13, %c0_14] : memref<1x64xf32, #tpu.memory_space<vmem>>, vector<1x64xf32>
    %28 = vector.broadcast %27 : vector<1x64xf32> to vector<8x64xf32>
    %29 = arith.addf %26, %28 : vector<8x64xf32>
    %c0_15 = arith.constant 0 : index
    %c0_16 = arith.constant 0 : index
    %30 = vector.load %arg6[%c0_15, %c0_16] : memref<64x64xf32, #tpu.memory_space<vmem>>, vector<64x64xf32>
    %cst_17 = arith.constant dense<0.000000e+00> : vector<8x64xf32>
    %31 = tpu.matmul %29, %30, %cst_17 {dimension_numbers = #tpu.dot_dimension_numbers<[1], [0], [0], [1], [0, 0, 1, 1], [], []>} : vector<8x64xf32>, vector<64x64xf32>, vector<8x64xf32> -> vector<8x64xf32>
    %c0_18 = arith.constant 0 : index
    %c0_19 = arith.constant 0 : index
    %32 = vector.load %arg7[%c0_18, %c0_19] : memref<1x64xf32, #tpu.memory_space<vmem>>, vector<1x64xf32>
    %33 = vector.broadcast %32 : vector<1x64xf32> to vector<8x64xf32>
    %34 = arith.addf %31, %33 : vector<8x64xf32>
    %cst_20 = arith.constant 0.000000e+00 : f32
    %35 = vector.broadcast %cst_20 : f32 to vector<8x64xf32>
    %36 = arith.maximumf %34, %35 : vector<8x64xf32>
    %cst_21 = arith.constant dense<0.000000e+00> : vector<8xf32>
    %37 = vector.multi_reduction <add>, %36, %cst_21 [1] : vector<8x64xf32> to vector<8xf32>
    %38 = vector.shape_cast %37 : vector<8xf32> to vector<8x1xf32>
    %cst_22 = arith.constant 6.400000e+01 : f32
    %39 = vector.broadcast %cst_22 : f32 to vector<8x1xf32>
    %40 = arith.divf %38, %39 : vector<8x1xf32>
    %41 = vector.broadcast %40 : vector<8x1xf32> to vector<8x64xf32>
    %42 = arith.subf %36, %41 : vector<8x64xf32>
    %43 = arith.mulf %42, %42 : vector<8x64xf32>
    %cst_23 = arith.constant dense<0.000000e+00> : vector<8xf32>
    %44 = vector.multi_reduction <add>, %43, %cst_23 [1] : vector<8x64xf32> to vector<8xf32>
    %45 = vector.shape_cast %44 : vector<8xf32> to vector<8x1xf32>
    %cst_24 = arith.constant 6.400000e+01 : f32
    %46 = vector.broadcast %cst_24 : f32 to vector<8x1xf32>
    %47 = arith.divf %45, %46 : vector<8x1xf32>
    %cst_25 = arith.constant 9.99999974E-6 : f32
    %48 = vector.broadcast %cst_25 : f32 to vector<8x1xf32>
    %49 = arith.addf %47, %48 : vector<8x1xf32>
    %50 = math.rsqrt %49 : vector<8x1xf32>
    %51 = vector.broadcast %50 : vector<8x1xf32> to vector<8x64xf32>
    %52 = arith.mulf %42, %51 : vector<8x64xf32>
    %c0_26 = arith.constant 0 : index
    %c0_27 = arith.constant 0 : index
    %53 = vector.load %arg8[%c0_26, %c0_27] : memref<1x64xf32, #tpu.memory_space<vmem>>, vector<1x64xf32>
    %54 = vector.broadcast %53 : vector<1x64xf32> to vector<8x64xf32>
    %55 = arith.mulf %52, %54 : vector<8x64xf32>
    %c0_28 = arith.constant 0 : index
    %c0_29 = arith.constant 0 : index
    %56 = vector.load %arg9[%c0_28, %c0_29] : memref<1x64xf32, #tpu.memory_space<vmem>>, vector<1x64xf32>
    %57 = vector.broadcast %56 : vector<1x64xf32> to vector<8x64xf32>
    %58 = arith.addf %55, %57 : vector<8x64xf32>
    %c0_30 = arith.constant 0 : index
    %c0_31 = arith.constant 0 : index
    %59 = vector.load %arg10[%c0_30, %c0_31] : memref<64x128xf32, #tpu.memory_space<vmem>>, vector<64x128xf32>
    %cst_32 = arith.constant dense<0.000000e+00> : vector<8x128xf32>
    %60 = tpu.matmul %58, %59, %cst_32 {dimension_numbers = #tpu.dot_dimension_numbers<[1], [0], [0], [1], [0, 0, 1, 1], [], []>} : vector<8x64xf32>, vector<64x128xf32>, vector<8x128xf32> -> vector<8x128xf32>
    %c0_33 = arith.constant 0 : index
    %c0_34 = arith.constant 0 : index
    %61 = vector.load %arg11[%c0_33, %c0_34] : memref<1x128xf32, #tpu.memory_space<vmem>>, vector<1x128xf32>
    %62 = vector.broadcast %61 : vector<1x128xf32> to vector<8x128xf32>
    %63 = arith.addf %60, %62 : vector<8x128xf32>
    %c0_35 = arith.constant 0 : index
    %c0_36 = arith.constant 0 : index
    %64 = vector.load %arg12[%c0_35, %c0_36] : memref<8x128xf32, #tpu.memory_space<vmem>>, vector<8x128xf32>
    tpu.vector_store %arg12[%c0_35, %c0_36], %63 {strides = array<i32>} : memref<8x128xf32, #tpu.memory_space<vmem>>, vector<8x128xf32>,
    return
  }
  func.func @transform_0(%arg0: i32) -> (i32, i32) {
    %c0_i32 = arith.constant 0 : i32
    %c0_i32_0 = arith.constant 0 : i32
    return %arg0, %c0_i32 : i32, i32
  }
  func.func @transform_1(%arg0: i32) -> (i32, i32) {
    %c0_i32 = arith.constant 0 : i32
    %c0_i32_0 = arith.constant 0 : i32
    %c0_i32_1 = arith.constant 0 : i32
    return %c0_i32, %c0_i32_0 : i32, i32
  }
  func.func @transform_2(%arg0: i32) -> (i32, i32) {
    %c0_i32 = arith.constant 0 : i32
    %c0_i32_0 = arith.constant 0 : i32
    %c0_i32_1 = arith.constant 0 : i32
    return %c0_i32, %c0_i32_0 : i32, i32
  }
  func.func @transform_3(%arg0: i32) -> (i32, i32) {
    %c0_i32 = arith.constant 0 : i32
    %c0_i32_0 = arith.constant 0 : i32
    %c0_i32_1 = arith.constant 0 : i32
    return %c0_i32, %c0_i32_0 : i32, i32
  }
  func.func @transform_4(%arg0: i32) -> (i32, i32) {
    %c0_i32 = arith.constant 0 : i32
    %c0_i32_0 = arith.constant 0 : i32
    %c0_i32_1 = arith.constant 0 : i32
    return %c0_i32, %c0_i32_0 : i32, i32
  }
  func.func @transform_5(%arg0: i32) -> (i32, i32) {
    %c0_i32 = arith.constant 0 : i32
    %c0_i32_0 = arith.constant 0 : i32
    %c0_i32_1 = arith.constant 0 : i32
    return %c0_i32, %c0_i32_0 : i32, i32
  }
  func.func @transform_6(%arg0: i32) -> (i32, i32) {
    %c0_i32 = arith.constant 0 : i32
    %c0_i32_0 = arith.constant 0 : i32
    %c0_i32_1 = arith.constant 0 : i32
    return %c0_i32, %c0_i32_0 : i32, i32
  }
  func.func @transform_7(%arg0: i32) -> (i32, i32) {
    %c0_i32 = arith.constant 0 : i32
    %c0_i32_0 = arith.constant 0 : i32
    %c0_i32_1 = arith.constant 0 : i32
    return %c0_i32, %c0_i32_0 : i32, i32
  }
  func.func @transform_8(%arg0: i32) -> (i32, i32) {
    %c0_i32 = arith.constant 0 : i32
    %c0_i32_0 = arith.constant 0 : i32
    %c0_i32_1 = arith.constant 0 : i32
    return %c0_i32, %c0_i32_0 : i32, i32
  }
  func.func @transform_9(%arg0: i32) -> (i32, i32) {
    %c0_i32 = arith.constant 0 : i32
    %c0_i32_0 = arith.constant 0 : i32
    %c0_i32_1 = arith.constant 0 : i32
    return %c0_i32, %c0_i32_0 : i32, i32
  }
  func.func @transform_10(%arg0: i32) -> (i32, i32) {
    %c0_i32 = arith.constant 0 : i32
    %c0_i32_0 = arith.constant 0 : i32
    %c0_i32_1 = arith.constant 0 : i32
    return %c0_i32, %c0_i32_0 : i32, i32
  }
  func.func @transform_11(%arg0: i32) -> (i32, i32) {
    %c0_i32 = arith.constant 0 : i32
    %c0_i32_0 = arith.constant 0 : i32
    return %arg0, %c0_i32 : i32, i32
  }
}

module attributes {stable_mosaic.version = 11 : i64} {
  func.func @kernel(%arg0: i32, %arg1: memref<8x128xf32, #tpu.memory_space<vmem>>, %arg2: memref<128x64xf32, #tpu.memory_space<vmem>>, %arg3: memref<1x64xf32, #tpu.memory_space<vmem>>, %arg4: memref<1x64xf32, #tpu.memory_space<vmem>>, %arg5: memref<1x64xf32, #tpu.memory_space<vmem>>, %arg6: memref<64x64xf32, #tpu.memory_space<vmem>>, %arg7: memref<1x64xf32, #tpu.memory_space<vmem>>, %arg8: memref<1x64xf32, #tpu.memory_space<vmem>>, %arg9: memref<1x64xf32, #tpu.memory_space<vmem>>, %arg10: memref<64x128xf32, #tpu.memory_space<vmem>>, %arg11: memref<1x128xf32, #tpu.memory_space<vmem>>, %arg12: memref<8x128xf32, #tpu.memory_space<vmem>>) attributes {dimension_semantics = [#tpu.dimension_semantics<parallel>], iteration_bounds = array<i64: 2>, scalar_prefetch = 0 : i64, scratch_operands = 0 : i64, tpu.core_type = #tpu.core_type<tc>, window_params = [{transform_indices = @transform_0, window_bounds = array<i64: 8, 128>}, {pipeline_mode = #tpu.pipeline_mode<synchronous>, transform_indices = @transform_1, window_bounds = array<i64: 128, 64>}, {pipeline_mode = #tpu.pipeline_mode<synchronous>, transform_indices = @transform_2, window_bounds = array<i64: 1, 64>}, {pipeline_mode = #tpu.pipeline_mode<synchronous>, transform_indices = @transform_3, window_bounds = array<i64: 1, 64>}, {pipeline_mode = #tpu.pipeline_mode<synchronous>, transform_indices = @transform_4, window_bounds = array<i64: 1, 64>}, {pipeline_mode = #tpu.pipeline_mode<synchronous>, transform_indices = @transform_5, window_bounds = array<i64: 64, 64>}, {pipeline_mode = #tpu.pipeline_mode<synchronous>, transform_indices = @transform_6, window_bounds = array<i64: 1, 64>}, {pipeline_mode = #tpu.pipeline_mode<synchronous>, transform_indices = @transform_7, window_bounds = array<i64: 1, 64>}, {pipeline_mode = #tpu.pipeline_mode<synchronous>, transform_indices = @transform_8, window_bounds = array<i64: 1, 64>}, {pipeline_mode = #tpu.pipeline_mode<synchronous>, transform_indices = @transform_9, window_bounds = array<i64: 64, 128>}, {pipeline_mode = #tpu.pipeline_mode<synchronous>, transform_indices = @transform_10, window_bounds = array<i64: 1, 128>}, {transform_indices = @transform_11, window_bounds = array<i64: 8, 128>}]} {
    %c0 = arith.constant 0 : index
    %c0_0 = arith.constant 0 : index
    %0 = vector.load %arg1[%c0, %c0_0] : memref<8x128xf32, #tpu.memory_space<vmem>>, vector<8x128xf32>
    %c0_1 = arith.constant 0 : index
    %c0_2 = arith.constant 0 : index
    %1 = vector.load %arg2[%c0_1, %c0_2] : memref<128x64xf32, #tpu.memory_space<vmem>>, vector<128x64xf32>
    %cst = arith.constant dense<0.000000e+00> : vector<8x64xf32>
    %2 = tpu.matmul %0, %1, %cst {dimension_numbers = #tpu.dot_dimension_numbers<[1], [0], [0], [1], [0, 0, 1, 1], [], []>} : vector<8x128xf32>, vector<128x64xf32>, vector<8x64xf32> -> vector<8x64xf32>
    %c0_3 = arith.constant 0 : index
    %c0_4 = arith.constant 0 : index
    %3 = vector.load %arg3[%c0_3, %c0_4] : memref<1x64xf32, #tpu.memory_space<vmem>>, vector<1x64xf32>
    %4 = vector.broadcast %3 : vector<1x64xf32> to vector<8x64xf32>
    %5 = arith.addf %2, %4 : vector<8x64xf32>
    %cst_5 = arith.constant 0.000000e+00 : f32
    %6 = vector.broadcast %cst_5 : f32 to vector<8x64xf32>
    %7 = arith.maximumf %5, %6 : vector<8x64xf32>
    %cst_6 = arith.constant dense<0.000000e+00> : vector<8xf32>
    %8 = vector.multi_reduction <add>, %7, %cst_6 [1] : vector<8x64xf32> to vector<8xf32>
    %9 = vector.shape_cast %8 : vector<8xf32> to vector<8x1xf32>
    %cst_7 = arith.constant 6.400000e+01 : f32
    %10 = vector.broadcast %cst_7 : f32 to vector<8x1xf32>
    %11 = arith.divf %9, %10 : vector<8x1xf32>
    %12 = vector.broadcast %11 : vector<8x1xf32> to vector<8x64xf32>
    %13 = arith.subf %7, %12 : vector<8x64xf32>
    %14 = arith.mulf %13, %13 : vector<8x64xf32>
    %cst_8 = arith.constant dense<0.000000e+00> : vector<8xf32>
    %15 = vector.multi_reduction <add>, %14, %cst_8 [1] : vector<8x64xf32> to vector<8xf32>
    %16 = vector.shape_cast %15 : vector<8xf32> to vector<8x1xf32>
    %cst_9 = arith.constant 6.400000e+01 : f32
    %17 = vector.broadcast %cst_9 : f32 to vector<8x1xf32>
    %18 = arith.divf %16, %17 : vector<8x1xf32>
    %cst_10 = arith.constant 9.99999974E-6 : f32
    %19 = vector.broadcast %cst_10 : f32 to vector<8x1xf32>
    %20 = arith.addf %18, %19 : vector<8x1xf32>
    %21 = math.rsqrt %20 : vector<8x1xf32>
    %22 = vector.broadcast %21 : vector<8x1xf32> to vector<8x64xf32>
    %23 = arith.mulf %13, %22 : vector<8x64xf32>
    %c0_11 = arith.constant 0 : index
    %c0_12 = arith.constant 0 : index
    %24 = vector.load %arg4[%c0_11, %c0_12] : memref<1x64xf32, #tpu.memory_space<vmem>>, vector<1x64xf32>
    %25 = vector.broadcast %24 : vector<1x64xf32> to vector<8x64xf32>
    %26 = arith.mulf %23, %25 : vector<8x64xf32>
    %c0_13 = arith.constant 0 : index
    %c0_14 = arith.constant 0 : index
    %27 = vector.load %arg5[%c0_13, %c0_14] : memref<1x64xf32, #tpu.memory_space<vmem>>, vector<1x64xf32>
    %28 = vector.broadcast %27 : vector<1x64xf32> to vector<8x64xf32>
    %29 = arith.addf %26, %28 : vector<8x64xf32>
    %c0_15 = arith.constant 0 : index
    %c0_16 = arith.constant 0 : index
    %30 = vector.load %arg6[%c0_15, %c0_16] : memref<64x64xf32, #tpu.memory_space<vmem>>, vector<64x64xf32>
    %cst_17 = arith.constant dense<0.000000e+00> : vector<8x64xf32>
    %31 = tpu.matmul %29, %30, %cst_17 {dimension_numbers = #tpu.dot_dimension_numbers<[1], [0], [0], [1], [0, 0, 1, 1], [], []>} : vector<8x64xf32>, vector<64x64xf32>, vector<8x64xf32> -> vector<8x64xf32>
    %c0_18 = arith.constant 0 : index
    %c0_19 = arith.constant 0 : index
    %32 = vector.load %arg7[%c0_18, %c0_19] : memref<1x64xf32, #tpu.memory_space<vmem>>, vector<1x64xf32>
    %33 = vector.broadcast %32 : vector<1x64xf32> to vector<8x64xf32>
    %34 = arith.addf %31, %33 : vector<8x64xf32>
    %cst_20 = arith.constant 0.000000e+00 : f32
    %35 = vector.broadcast %cst_20 : f32 to vector<8x64xf32>
    %36 = arith.maximumf %34, %35 : vector<8x64xf32>
    %cst_21 = arith.constant dense<0.000000e+00> : vector<8xf32>
    %37 = vector.multi_reduction <add>, %36, %cst_21 [1] : vector<8x64xf32> to vector<8xf32>
    %38 = vector.shape_cast %37 : vector<8xf32> to vector<8x1xf32>
    %cst_22 = arith.constant 6.400000e+01 : f32
    %39 = vector.broadcast %cst_22 : f32 to vector<8x1xf32>
    %40 = arith.divf %38, %39 : vector<8x1xf32>
    %41 = vector.broadcast %40 : vector<8x1xf32> to vector<8x64xf32>
    %42 = arith.subf %36, %41 : vector<8x64xf32>
    %43 = arith.mulf %42, %42 : vector<8x64xf32>
    %cst_23 = arith.constant dense<0.000000e+00> : vector<8xf32>
    %44 = vector.multi_reduction <add>, %43, %cst_23 [1] : vector<8x64xf32> to vector<8xf32>
    %45 = vector.shape_cast %44 : vector<8xf32> to vector<8x1xf32>
    %cst_24 = arith.constant 6.400000e+01 : f32
    %46 = vector.broadcast %cst_24 : f32 to vector<8x1xf32>
    %47 = arith.divf %45, %46 : vector<8x1xf32>
    %cst_25 = arith.constant 9.99999974E-6 : f32
    %48 = vector.broadcast %cst_25 : f32 to vector<8x1xf32>
    %49 = arith.addf %47, %48 : vector<8x1xf32>
    %50 = math.rsqrt %49 : vector<8x1xf32>
    %51 = vector.broadcast %50 : vector<8x1xf32> to vector<8x64xf32>
    %52 = arith.mulf %42, %51 : vector<8x64xf32>
    %c0_26 = arith.constant 0 : index
    %c0_27 = arith.constant 0 : index
    %53 = vector.load %arg8[%c0_26, %c0_27] : memref<1x64xf32, #tpu.memory_space<vmem>>, vector<1x64xf32>
    %54 = vector.broadcast %53 : vector<1x64xf32> to vector<8x64xf32>
    %55 = arith.mulf %52, %54 : vector<8x64xf32>
    %c0_28 = arith.constant 0 : index
    %c0_29 = arith.constant 0 : index
    %56 = vector.load %arg9[%c0_28, %c0_29] : memref<1x64xf32, #tpu.memory_space<vmem>>, vector<1x64xf32>
    %57 = vector.broadcast %56 : vector<1x64xf32> to vector<8x64xf32>
    %58 = arith.addf %55, %57 : vector<8x64xf32>
    %c0_30 = arith.constant 0 : index
    %c0_31 = arith.constant 0 : index
    %59 = vector.load %arg10[%c0_30, %c0_31] : memref<64x128xf32, #tpu.memory_space<vmem>>, vector<64x128xf32>
    %cst_32 = arith.constant dense<0.000000e+00> : vector<8x128xf32>
    %60 = tpu.matmul %58, %59, %cst_32 {dimension_numbers = #tpu.dot_dimension_numbers<[1], [0], [0], [1], [0, 0, 1, 1], [], []>} : vector<8x64xf32>, vector<64x128xf32>, vector<8x128xf32> -> vector<8x128xf32>
    %c0_33 = arith.constant 0 : index
    %c0_34 = arith.constant 0 : index
    %61 = vector.load %arg11[%c0_33, %c0_34] : memref<1x128xf32, #tpu.memory_space<vmem>>, vector<1x128xf32>
    %62 = vector.broadcast %61 : vector<1x128xf32> to vector<8x128xf32>
    %63 = arith.addf %60, %62 : vector<8x128xf32>
    %c0_35 = arith.constant 0 : index
    %c0_36 = arith.constant 0 : index
    %64 = vector.load %arg12[%c0_35, %c0_36] : memref<8x128xf32, #tpu.memory_space<vmem>>, vector<8x128xf32>
    tpu.vector_store %arg12[%c0_35, %c0_36], %63 {strides = array<i32>} : memref<8x128xf32, #tpu.memory_space<vmem>>, vector<8x128xf32>,
    return
  }
  func.func @transform_0(%arg0: i32) -> (i32, i32) {
    %c0_i32 = arith.constant 0 : i32
    %c0_i32_0 = arith.constant 0 : i32
    return %arg0, %c0_i32 : i32, i32
  }
  func.func @transform_1(%arg0: i32) -> (i32, i32) {
    %c0_i32 = arith.constant 0 : i32
    %c0_i32_0 = arith.constant 0 : i32
    %c0_i32_1 = arith.constant 0 : i32
    return %c0_i32, %c0_i32_0 : i32, i32
  }
  func.func @transform_2(%arg0: i32) -> (i32, i32) {
    %c0_i32 = arith.constant 0 : i32
    %c0_i32_0 = arith.constant 0 : i32
    %c0_i32_1 = arith.constant 0 : i32
    return %c0_i32, %c0_i32_0 : i32, i32
  }
  func.func @transform_3(%arg0: i32) -> (i32, i32) {
    %c0_i32 = arith.constant 0 : i32
    %c0_i32_0 = arith.constant 0 : i32
    %c0_i32_1 = arith.constant 0 : i32
    return %c0_i32, %c0_i32_0 : i32, i32
  }
  func.func @transform_4(%arg0: i32) -> (i32, i32) {
    %c0_i32 = arith.constant 0 : i32
    %c0_i32_0 = arith.constant 0 : i32
    %c0_i32_1 = arith.constant 0 : i32
    return %c0_i32, %c0_i32_0 : i32, i32
  }
  func.func @transform_5(%arg0: i32) -> (i32, i32) {
    %c0_i32 = arith.constant 0 : i32
    %c0_i32_0 = arith.constant 0 : i32
    %c0_i32_1 = arith.constant 0 : i32
    return %c0_i32, %c0_i32_0 : i32, i32
  }
  func.func @transform_6(%arg0: i32) -> (i32, i32) {
    %c0_i32 = arith.constant 0 : i32
    %c0_i32_0 = arith.constant 0 : i32
    %c0_i32_1 = arith.constant 0 : i32
    return %c0_i32, %c0_i32_0 : i32, i32
  }
  func.func @transform_7(%arg0: i32) -> (i32, i32) {
    %c0_i32 = arith.constant 0 : i32
    %c0_i32_0 = arith.constant 0 : i32
    %c0_i32_1 = arith.constant 0 : i32
    return %c0_i32, %c0_i32_0 : i32, i32
  }
  func.func @transform_8(%arg0: i32) -> (i32, i32) {
    %c0_i32 = arith.constant 0 : i32
    %c0_i32_0 = arith.constant 0 : i32
    %c0_i32_1 = arith.constant 0 : i32
    return %c0_i32, %c0_i32_0 : i32, i32
  }
  func.func @transform_9(%arg0: i32) -> (i32, i32) {
    %c0_i32 = arith.constant 0 : i32
    %c0_i32_0 = arith.constant 0 : i32
    %c0_i32_1 = arith.constant 0 : i32
    return %c0_i32, %c0_i32_0 : i32, i32
  }
  func.func @transform_10(%arg0: i32) -> (i32, i32) {
    %c0_i32 = arith.constant 0 : i32
    %c0_i32_0 = arith.constant 0 : i32
    %c0_i32_1 = arith.constant 0 : i32
    return %c0_i32, %c0_i32_0 : i32, i32
  }
  func.func @transform_11(%arg0: i32) -> (i32, i32) {
    %c0_i32 = arith.constant 0 : i32
    %c0_i32_0 = arith.constant 0 : i32
    return %arg0, %c0_i32 : i32, i32
  }
}

</mosaic_0001>

<llo_original>
// kernel: tpu_custom_call.1
$region0: #{tpu_custom_call.1}
  #allocation0 [shape = 'u32[]', space=smem, size = 0x4, offset = 0x4, fixed_abs, tag = 'smem constant byte address 0x4 - core index']
  #allocation1 [shape = 'u32[144,128]{1,0:T(1,128)}', space=vmem, size = 0x12000, scoped, tag = 'internal scratch']
  %s0 = inlined_call_operand.vmem [shape: f32[16,128], index: 0, kind: input, shape index: {}]
  %s1 = inlined_call_operand.vmem [shape: f32[128,64], index: 1, kind: input, shape index: {}]
  %s2 = inlined_call_operand.vmem [shape: f32[1,64], index: 2, kind: input, shape index: {}]
  %s3 = inlined_call_operand.vmem [shape: f32[1,64], index: 3, kind: input, shape index: {}]
  %s4 = inlined_call_operand.vmem [shape: f32[1,64], index: 4, kind: input, shape index: {}]
  %s5 = inlined_call_operand.vmem [shape: f32[64,64], index: 5, kind: input, shape index: {}]
  %s6 = inlined_call_operand.vmem [shape: f32[1,64], index: 6, kind: input, shape index: {}]
  %s7 = inlined_call_operand.vmem [shape: f32[1,64], index: 7, kind: input, shape index: {}]
  %s8 = inlined_call_operand.vmem [shape: f32[1,64], index: 8, kind: input, shape index: {}]
  %s9 = inlined_call_operand.vmem [shape: f32[64,128], index: 9, kind: input, shape index: {}]
  %s10 = inlined_call_operand.vmem [shape: f32[1,128], index: 10, kind: input, shape index: {}]
  %s11 = inlined_call_operand.hbm [shape: f32[16,128], index: 11, kind: output, shape index: {}]
  %s12 = sld [smem:[#allocation0]]
  $region77: #{tpu_custom_call.1} parent=0
    _
  %s14 = ssub.s32 1, %s12
  %s15 = scalar_select 0, %s14, %s12
  $region1: #{tpu_custom_call.1} parent=0
    #allocation2 [shape = 'u8[8192]{0}', space=vmem, size = 0x2000, scoped, tag = 'output window, operand 0']
    #allocation3 [shape = 's32[2]{0}', space=sflag, size = 0x8, scoped, tag = 'scoped memory for tpu_custom_call.1']
    %16 = vsyncpa [#allocation3], 0
    %s17 = scalar_lea.sflag [#allocation3], 1
    %18 = vsyncpa %s17, 0
    loop: start=0, step=1, limit=4
    $region2: #{tpu_custom_call.1} parent=1 // loop_pre_header
      _
    $region3: #{tpu_custom_call.1} parent=1 // loop_header
      %s20 = sphi 0, %s24
      %p21 = scmp.ge.s32.totalorder %s20, 4
      %s30 = sphi 0, %s32
      %s33 = sphi 0, %s30
      %s34 = sphi 0, %s33
      %s50 = sphi 0, %s34
      %s54 = sphi 0, %s54
      %s56 = sphi 0, %s54
      %s57 = sphi 0, %s56
      %s71 = sphi 0, %s57
      %s75 = sphi 0, %s75
      %s77 = sphi 0, %s75
      %s78 = sphi 0, %s77
      %s92 = sphi 0, %s78
      %s96 = sphi 0, %s96
      %s98 = sphi 0, %s96
      %s99 = sphi 0, %s98
      %s113 = sphi 0, %s99
      %s117 = sphi 0, %s117
      %s119 = sphi 0, %s117
      %s120 = sphi 0, %s119
      %s134 = sphi 0, %s120
      %s138 = sphi 0, %s138
      %s140 = sphi 0, %s138
      %s141 = sphi 0, %s140
      %s155 = sphi 0, %s141
      %s159 = sphi 0, %s159
      %s161 = sphi 0, %s159
      %s162 = sphi 0, %s161
      %s176 = sphi 0, %s162
      %s180 = sphi 0, %s180
      %s182 = sphi 0, %s180
      %s183 = sphi 0, %s182
      %s197 = sphi 0, %s183
      %s201 = sphi 0, %s201
      %s203 = sphi 0, %s201
      %s204 = sphi 0, %s203
      %s218 = sphi 0, %s204
      %s222 = sphi 0, %s222
      %s224 = sphi 0, %s222
      %s225 = sphi 0, %s224
      %s239 = sphi 0, %s225
      %s243 = sphi 0, %s243
      %s245 = sphi 0, %s243
      %s246 = sphi 0, %s245
      %s260 = sphi 0, %s246
      %s266 = sphi 0, %s268
      %s269 = sphi 0, %s266
      %s270 = sphi 0, %s269
      %s286 = sphi 0, %s270
    $region4: #{tpu_custom_call.1} parent=1 // loop_header_branch
      %23 = sbr.rel (%p21) target = $region8
    $region5: #{tpu_custom_call.1} parent=1 // loop_body
      %s25 = ssub.s32 %s20, 1
      %s26 = ssub.s32 %s20, 2
      %s27 = sadd.s32 %s20, 1
      %s28 = ssub.s32 %s20, %s27
      %p29 = scmp.eq.s32.totalorder %s28, 0
      %s31 = sadd.s32 %s30, 1
      %s32 = scalar_select %p29, %s30, %s31
      %p35 = pneg %p29
      %p36 = scmp.eq.s32.totalorder %s20, 1
      %p37 = por %p35, %p36
      %p38 = scmp.ne.s32.totalorder %s30, %s33
      %p39 = scmp.eq.s32.totalorder %s20, 0
      %p40 = por %p38, %p39
      %p41 = scmp.ne.s32.totalorder %s30, %s33
      %p42 = scmp.eq.s32.totalorder %s25, 1
      %p43 = por %p41, %p42
      %p44 = scmp.ne.s32.totalorder %s33, %s34
      %p45 = scmp.eq.s32.totalorder %s25, 0
      %p46 = por %p44, %p45
      %p47 = scmp.ne.s32.totalorder %s33, %s34
      %p48 = scmp.eq.s32.totalorder %s26, 1
      %p49 = por %p47, %p48
      %p51 = scmp.ne.s32.totalorder %s34, %s50
      %p52 = scmp.eq.s32.totalorder %s26, 0
      %p53 = por %p51, %p52
      %s55 = sadd.s32 %s54, 1
      %p58 = scmp.eq.s32.totalorder %s20, 1
      %p59 = scmp.ne.s32.totalorder %s54, %s56
      %p60 = scmp.eq.s32.totalorder %s20, 0
      %p61 = por %p59, %p60
      %p62 = scmp.ne.s32.totalorder %s54, %s56
      %p63 = scmp.eq.s32.totalorder %s25, 1
      %p64 = por %p62, %p63
      %p65 = scmp.ne.s32.totalorder %s56, %s57
      %p66 = scmp.eq.s32.totalorder %s25, 0
      %p67 = por %p65, %p66
      %p68 = scmp.ne.s32.totalorder %s56, %s57
      %p69 = scmp.eq.s32.totalorder %s26, 1
      %p70 = por %p68, %p69
      %p72 = scmp.ne.s32.totalorder %s57, %s71
      %p73 = scmp.eq.s32.totalorder %s26, 0
      %p74 = por %p72, %p73
      %s76 = sadd.s32 %s75, 1
      %p79 = scmp.eq.s32.totalorder %s20, 1
      %p80 = scmp.ne.s32.totalorder %s75, %s77
      %p81 = scmp.eq.s32.totalorder %s20, 0
      %p82 = por %p80, %p81
      %p83 = scmp.ne.s32.totalorder %s75, %s77
      %p84 = scmp.eq.s32.totalorder %s25, 1
      %p85 = por %p83, %p84
      %p86 = scmp.ne.s32.totalorder %s77, %s78
      %p87 = scmp.eq.s32.totalorder %s25, 0
      %p88 = por %p86, %p87
      %p89 = scmp.ne.s32.totalorder %s77, %s78
      %p90 = scmp.eq.s32.totalorder %s26, 1
      %p91 = por %p89, %p90
      %p93 = scmp.ne.s32.totalorder %s78, %s92
      %p94 = scmp.eq.s32.totalorder %s26, 0
      %p95 = por %p93, %p94
      %s97 = sadd.s32 %s96, 1
      %p100 = scmp.eq.s32.totalorder %s20, 1
      %p101 = scmp.ne.s32.totalorder %s96, %s98
      %p102 = scmp.eq.s32.totalorder %s20, 0
      %p103 = por %p101, %p102
      %p104 = scmp.ne.s32.totalorder %s96, %s98
      %p105 = scmp.eq.s32.totalorder %s25, 1
      %p106 = por %p104, %p105
      %p107 = scmp.ne.s32.totalorder %s98, %s99
      %p108 = scmp.eq.s32.totalorder %s25, 0
      %p109 = por %p107, %p108
      %p110 = scmp.ne.s32.totalorder %s98, %s99
      %p111 = scmp.eq.s32.totalorder %s26, 1
      %p112 = por %p110, %p111
      %p114 = scmp.ne.s32.totalorder %s99, %s113
      %p115 = scmp.eq.s32.totalorder %s26, 0
      %p116 = por %p114, %p115
      %s118 = sadd.s32 %s117, 1
      %p121 = scmp.eq.s32.totalorder %s20, 1
      %p122 = scmp.ne.s32.totalorder %s117, %s119
      %p123 = scmp.eq.s32.totalorder %s20, 0
      %p124 = por %p122, %p123
      %p125 = scmp.ne.s32.totalorder %s117, %s119
      %p126 = scmp.eq.s32.totalorder %s25, 1
      %p127 = por %p125, %p126
      %p128 = scmp.ne.s32.totalorder %s119, %s120
      %p129 = scmp.eq.s32.totalorder %s25, 0
      %p130 = por %p128, %p129
      %p131 = scmp.ne.s32.totalorder %s119, %s120
      %p132 = scmp.eq.s32.totalorder %s26, 1
      %p133 = por %p131, %p132
      %p135 = scmp.ne.s32.totalorder %s120, %s134
      %p136 = scmp.eq.s32.totalorder %s26, 0
      %p137 = por %p135, %p136
      %s139 = sadd.s32 %s138, 1
      %p142 = scmp.eq.s32.totalorder %s20, 1
      %p143 = scmp.ne.s32.totalorder %s138, %s140
      %p144 = scmp.eq.s32.totalorder %s20, 0
      %p145 = por %p143, %p144
      %p146 = scmp.ne.s32.totalorder %s138, %s140
      %p147 = scmp.eq.s32.totalorder %s25, 1
      %p148 = por %p146, %p147
      %p149 = scmp.ne.s32.totalorder %s140, %s141
      %p150 = scmp.eq.s32.totalorder %s25, 0
      %p151 = por %p149, %p150
      %p152 = scmp.ne.s32.totalorder %s140, %s141
      %p153 = scmp.eq.s32.totalorder %s26, 1
      %p154 = por %p152, %p153
      %p156 = scmp.ne.s32.totalorder %s141, %s155
      %p157 = scmp.eq.s32.totalorder %s26, 0
      %p158 = por %p156, %p157
      %s160 = sadd.s32 %s159, 1
      %p163 = scmp.eq.s32.totalorder %s20, 1
      %p164 = scmp.ne.s32.totalorder %s159, %s161
      %p165 = scmp.eq.s32.totalorder %s20, 0
      %p166 = por %p164, %p165
      %p167 = scmp.ne.s32.totalorder %s159, %s161
      %p168 = scmp.eq.s32.totalorder %s25, 1
      %p169 = por %p167, %p168
      %p170 = scmp.ne.s32.totalorder %s161, %s162
      %p171 = scmp.eq.s32.totalorder %s25, 0
      %p172 = por %p170, %p171
      %p173 = scmp.ne.s32.totalorder %s161, %s162
      %p174 = scmp.eq.s32.totalorder %s26, 1
      %p175 = por %p173, %p174
      %p177 = scmp.ne.s32.totalorder %s162, %s176
      %p178 = scmp.eq.s32.totalorder %s26, 0
      %p179 = por %p177, %p178
      %s181 = sadd.s32 %s180, 1
      %p184 = scmp.eq.s32.totalorder %s20, 1
      %p185 = scmp.ne.s32.totalorder %s180, %s182
      %p186 = scmp.eq.s32.totalorder %s20, 0
      %p187 = por %p185, %p186
      %p188 = scmp.ne.s32.totalorder %s180, %s182
      %p189 = scmp.eq.s32.totalorder %s25, 1
      %p190 = por %p188, %p189
      %p191 = scmp.ne.s32.totalorder %s182, %s183
      %p192 = scmp.eq.s32.totalorder %s25, 0
      %p193 = por %p191, %p192
      %p194 = scmp.ne.s32.totalorder %s182, %s183
      %p195 = scmp.eq.s32.totalorder %s26, 1
      %p196 = por %p194, %p195
      %p198 = scmp.ne.s32.totalorder %s183, %s197
      %p199 = scmp.eq.s32.totalorder %s26, 0
      %p200 = por %p198, %p199
      %s202 = sadd.s32 %s201, 1
      %p205 = scmp.eq.s32.totalorder %s20, 1
      %p206 = scmp.ne.s32.totalorder %s201, %s203
      %p207 = scmp.eq.s32.totalorder %s20, 0
      %p208 = por %p206, %p207
      %p209 = scmp.ne.s32.totalorder %s201, %s203
      %p210 = scmp.eq.s32.totalorder %s25, 1
      %p211 = por %p209, %p210
      %p212 = scmp.ne.s32.totalorder %s203, %s204
      %p213 = scmp.eq.s32.totalorder %s25, 0
      %p214 = por %p212, %p213
      %p215 = scmp.ne.s32.totalorder %s203, %s204
      %p216 = scmp.eq.s32.totalorder %s26, 1
      %p217 = por %p215, %p216
      %p219 = scmp.ne.s32.totalorder %s204, %s218
      %p220 = scmp.eq.s32.totalorder %s26, 0
      %p221 = por %p219, %p220
      %s223 = sadd.s32 %s222, 1
      %p226 = scmp.eq.s32.totalorder %s20, 1
      %p227 = scmp.ne.s32.totalorder %s222, %s224
      %p228 = scmp.eq.s32.totalorder %s20, 0
      %p229 = por %p227, %p228
      %p230 = scmp.ne.s32.totalorder %s222, %s224
      %p231 = scmp.eq.s32.totalorder %s25, 1
      %p232 = por %p230, %p231
      %p233 = scmp.ne.s32.totalorder %s224, %s225
      %p234 = scmp.eq.s32.totalorder %s25, 0
      %p235 = por %p233, %p234
      %p236 = scmp.ne.s32.totalorder %s224, %s225
      %p237 = scmp.eq.s32.totalorder %s26, 1
      %p238 = por %p236, %p237
      %p240 = scmp.ne.s32.totalorder %s225, %s239
      %p241 = scmp.eq.s32.totalorder %s26, 0
      %p242 = por %p240, %p241
      %s244 = sadd.s32 %s243, 1
      %p247 = scmp.eq.s32.totalorder %s20, 1
      %p248 = scmp.ne.s32.totalorder %s243, %s245
      %p249 = scmp.eq.s32.totalorder %s20, 0
      %p250 = por %p248, %p249
      %p251 = scmp.ne.s32.totalorder %s243, %s245
      %p252 = scmp.eq.s32.totalorder %s25, 1
      %p253 = por %p251, %p252
      %p254 = scmp.ne.s32.totalorder %s245, %s246
      %p255 = scmp.eq.s32.totalorder %s25, 0
      %p256 = por %p254, %p255
      %p257 = scmp.ne.s32.totalorder %s245, %s246
      %p258 = scmp.eq.s32.totalorder %s26, 1
      %p259 = por %p257, %p258
      %p261 = scmp.ne.s32.totalorder %s246, %s260
      %p262 = scmp.eq.s32.totalorder %s26, 0
      %p263 = por %p261, %p262
      %s264 = ssub.s32 %s20, %s27
      %p265 = scmp.eq.s32.totalorder %s264, 0
      %s267 = sadd.s32 %s266, 1
      %s268 = scalar_select %p265, %s266, %s267
      %p271 = pneg %p265
      %p272 = scmp.eq.s32.totalorder %s20, 1
      %p273 = por %p271, %p272
      %p274 = scmp.ne.s32.totalorder %s266, %s269
      %p275 = scmp.eq.s32.totalorder %s20, 0
      %p276 = por %p274, %p275
      %p277 = scmp.ne.s32.totalorder %s266, %s269
      %p278 = scmp.eq.s32.totalorder %s25, 1
      %p279 = por %p277, %p278
      %p280 = scmp.ne.s32.totalorder %s269, %s270
      %p281 = scmp.eq.s32.totalorder %s25, 0
      %p282 = por %p280, %p281
      %p283 = scmp.ne.s32.totalorder %s269, %s270
      %p284 = scmp.eq.s32.totalorder %s26, 1
      %p285 = por %p283, %p284
      %p287 = scmp.ne.s32.totalorder %s270, %s286
      %p288 = scmp.eq.s32.totalorder %s26, 0
      %p289 = por %p287, %p288
      %p290 = scmp.le.s32.totalorder 1, %s20
      %p291 = scmp.lt.s32.totalorder %s20, 3
      %p292 = pnand %p290, %p291
      %p293 = pneg %p292
      // Predicated region
      $region9: #{tpu_custom_call.1} parent=5 // pred_check
        _
      $region10: #{tpu_custom_call.1} parent=5 // pred_check_branch
        %295 = sbr.rel (%p292) target = $region12
      $region11: #{tpu_custom_call.1} parent=5 // pred_region
        %s296 = ssub.s32 %s20, 1
        // Predicated region
        $region13: #{tpu_custom_call.1} parent=11 // pred_check
          %p297 = pneg %p67
        $region14: #{tpu_custom_call.1} parent=11 // pred_check_branch
          %299 = sbr.rel (%p297) target = $region16
        $region15: #{tpu_custom_call.1} parent=11 // pred_region
          _
        $region16: #{tpu_custom_call.1} parent=11 // pred_fallthru
          _
        // Predicated region
        $region17: #{tpu_custom_call.1} parent=11 // pred_check
          %p300 = pneg %p88
        $region18: #{tpu_custom_call.1} parent=11 // pred_check_branch
          %302 = sbr.rel (%p300) target = $region20
        $region19: #{tpu_custom_call.1} parent=11 // pred_region
          _
        $region20: #{tpu_custom_call.1} parent=11 // pred_fallthru
          _
        // Predicated region
        $region21: #{tpu_custom_call.1} parent=11 // pred_check
          %p303 = pneg %p109
        $region22: #{tpu_custom_call.1} parent=11 // pred_check_branch
          %305 = sbr.rel (%p303) target = $region24
        $region23: #{tpu_custom_call.1} parent=11 // pred_region
          _
        $region24: #{tpu_custom_call.1} parent=11 // pred_fallthru
          _
        // Predicated region
        $region25: #{tpu_custom_call.1} parent=11 // pred_check
          %p306 = pneg %p130
        $region26: #{tpu_custom_call.1} parent=11 // pred_check_branch
          %308 = sbr.rel (%p306) target = $region28
        $region27: #{tpu_custom_call.1} parent=11 // pred_region
          _
        $region28: #{tpu_custom_call.1} parent=11 // pred_fallthru
          _
        // Predicated region
        $region29: #{tpu_custom_call.1} parent=11 // pred_check
          %p309 = pneg %p151
        $region30: #{tpu_custom_call.1} parent=11 // pred_check_branch
          %311 = sbr.rel (%p309) target = $region32
        $region31: #{tpu_custom_call.1} parent=11 // pred_region
          _
        $region32: #{tpu_custom_call.1} parent=11 // pred_fallthru
          _
        // Predicated region
        $region33: #{tpu_custom_call.1} parent=11 // pred_check
          %p312 = pneg %p172
        $region34: #{tpu_custom_call.1} parent=11 // pred_check_branch
          %314 = sbr.rel (%p312) target = $region36
        $region35: #{tpu_custom_call.1} parent=11 // pred_region
          _
        $region36: #{tpu_custom_call.1} parent=11 // pred_fallthru
          _
        // Predicated region
        $region37: #{tpu_custom_call.1} parent=11 // pred_check
          %p315 = pneg %p193
        $region38: #{tpu_custom_call.1} parent=11 // pred_check_branch
          %317 = sbr.rel (%p315) target = $region40
        $region39: #{tpu_custom_call.1} parent=11 // pred_region
          _
        $region40: #{tpu_custom_call.1} parent=11 // pred_fallthru
          _
        // Predicated region
        $region41: #{tpu_custom_call.1} parent=11 // pred_check
          %p318 = pneg %p214
        $region42: #{tpu_custom_call.1} parent=11 // pred_check_branch
          %320 = sbr.rel (%p318) target = $region44
        $region43: #{tpu_custom_call.1} parent=11 // pred_region
          _
        $region44: #{tpu_custom_call.1} parent=11 // pred_fallthru
          _
        // Predicated region
        $region45: #{tpu_custom_call.1} parent=11 // pred_check
          %p321 = pneg %p235
        $region46: #{tpu_custom_call.1} parent=11 // pred_check_branch
          %323 = sbr.rel (%p321) target = $region48
        $region47: #{tpu_custom_call.1} parent=11 // pred_region
          _
        $region48: #{tpu_custom_call.1} parent=11 // pred_fallthru
          _
        // Predicated region
        $region49: #{tpu_custom_call.1} parent=11 // pred_check
          %p324 = pneg %p256
        $region50: #{tpu_custom_call.1} parent=11 // pred_check_branch
          %326 = sbr.rel (%p324) target = $region52
        $region51: #{tpu_custom_call.1} parent=11 // pred_region
          _
        $region52: #{tpu_custom_call.1} parent=11 // pred_fallthru
          _
      $region12: #{tpu_custom_call.1} parent=5 // pred_fallthru
        _
      %p327 = scmp.lt.s32.totalorder %s20, 2
      // Predicated region
      $region53: #{tpu_custom_call.1} parent=5 // pred_check
        %p328 = pneg %p327
      $region54: #{tpu_custom_call.1} parent=5 // pred_check_branch
        %330 = sbr.rel (%p328) target = $region56
      $region55: #{tpu_custom_call.1} parent=5 // pred_region
        // Predicated region
        $region57: #{tpu_custom_call.1} parent=55 // pred_check
          %p331 = pneg %p40
        $region58: #{tpu_custom_call.1} parent=55 // pred_check_branch
          %333 = sbr.rel (%p331) target = $region60
        $region59: #{tpu_custom_call.1} parent=55 // pred_region
          %p334 = scmp.lt.s32.totalorder %s20, 1
          %s335 = scalar_select %p334, %s20, 1
          %s336 = smul.addr %s335, 8
          %s337 = scalar_lea.vmem %s0, %s336
        $region60: #{tpu_custom_call.1} parent=55 // pred_fallthru
          _
      $region56: #{tpu_custom_call.1} parent=5 // pred_fallthru
        _
      %p338 = scmp.le.s32.totalorder 1, %s20
      %p339 = scmp.lt.s32.totalorder %s20, 3
      %p340 = pnand %p338, %p339
      %p341 = pneg %p340
      // Predicated region
      $region61: #{tpu_custom_call.1} parent=5 // pred_check
        _
      $region62: #{tpu_custom_call.1} parent=5 // pred_check_branch
        %343 = sbr.rel (%p340) target = $region64
      $region63: #{tpu_custom_call.1} parent=5 // pred_region
        %s344 = ssub.s32 %s20, 1
        %p345 = scmp.lt.s32.totalorder %s25, 1
        %s346 = scalar_select %p345, %s25, 1
        %s347 = smul.addr %s346, 8
        %s348 = scalar_lea.vmem %s0, %s347
        %p349 = pneg %p46
        %p350 = pneg %p43
        %p351 = pneg %p67
        %p352 = pneg %p64
        %p353 = pneg %p88
        %p354 = pneg %p85
        %p355 = pneg %p109
        %p356 = pneg %p106
        %p357 = pneg %p130
        %p358 = pneg %p127
        %p359 = pneg %p151
        %p360 = pneg %p148
        %p361 = pneg %p172
        %p362 = pneg %p169
        %p363 = pneg %p193
        %p364 = pneg %p190
        %p365 = pneg %p214
        %p366 = pneg %p211
        %p367 = pneg %p235
        %p368 = pneg %p232
        %p369 = pneg %p256
        %p370 = pneg %p253
        %p371 = pneg %p282
        %p372 = pneg %p279
        %s373 = sand.u32 %s269, 1
        %s374 = scalar_lea.sflag [#allocation3], %s373
        %s375 = sand.u32 %s269, 1
        %s376 = smul.addr %s375, 8
        %s377 = scalar_lea.vmem [#allocation2], %s376
        %p378 = scmp.lt.s32.totalorder %s25, 1
        %s379 = scalar_select %p378, %s25, 1
        %s380 = smul.addr %s379, 8
        %s381 = scalar_lea.vmem %s0, %s380
        %v382 = vld [vmem:[%s381] sm:$0xff]
        %v383 = vld [vmem:[%s1] sm:$0xff]
        %v384 = vld [vmem:[%s1 + $0x8] sm:$0xff]
        %v385 = vld [vmem:[%s1 + $0x10] sm:$0xff]
        %v386 = vld [vmem:[%s1 + $0x18] sm:$0xff]
        %v387 = vld [vmem:[%s1 + $0x20] sm:$0xff]
        %v388 = vld [vmem:[%s1 + $0x28] sm:$0xff]
        %v389 = vld [vmem:[%s1 + $0x30] sm:$0xff]
        %v390 = vld [vmem:[%s1 + $0x38] sm:$0xff]
        %v391 = vld [vmem:[%s1 + $0x40] sm:$0xff]
        %v392 = vld [vmem:[%s1 + $0x48] sm:$0xff]
        %v393 = vld [vmem:[%s1 + $0x50] sm:$0xff]
        %v394 = vld [vmem:[%s1 + $0x58] sm:$0xff]
        %v395 = vld [vmem:[%s1 + $0x60] sm:$0xff]
        %v396 = vld [vmem:[%s1 + $0x68] sm:$0xff]
        %v397 = vld [vmem:[%s1 + $0x70] sm:$0xff]
        %v398 = vld [vmem:[%s1 + $0x78] sm:$0xff]
        %v399 = vld [vmem:[%s2] sm:$0x1]
        %v401 = vlaneseq
        %v402 = vshrl.u32 %v401, 7
        %v403 = vsub.s32 0, %v402
        %v404 = vrot.slane %v399, %v403
        %406 = vmatprep.subr.mxu0 0.0
        %407 = vmatpush1.msra.mxu0 %v383
        %408 = vmatprep.subr.mxu0 0.0
        %409 = vmatpush1.msra.mxu0 %v384
        %410 = vmatprep.subr.mxu0 0.0
        %411 = vmatpush1.msra.mxu0 %v385
        %412 = vmatprep.subr.mxu0 0.0
        %413 = vmatpush1.msra.mxu0 %v386
        %414 = vmatprep.subr.mxu0 0.0
        %415 = vmatpush1.msra.mxu0 %v387
        %416 = vmatprep.subr.mxu0 0.0
        %417 = vmatpush1.msra.mxu0 %v388
        %418 = vmatprep.subr.mxu0 0.0
        %419 = vmatpush1.msra.mxu0 %v389
        %420 = vmatprep.subr.mxu0 0.0
        %421 = vmatpush1.msra.mxu0 %v390
        %422 = vmatprep.subr.mxu0 0.0
        %423 = vmatpush1.msra.mxu0 %v391
        %424 = vmatprep.subr.mxu0 0.0
        %425 = vmatpush1.msra.mxu0 %v392
        %426 = vmatprep.subr.mxu0 0.0
        %427 = vmatpush1.msra.mxu0 %v393
        %428 = vmatprep.subr.mxu0 0.0
        %429 = vmatpush1.msra.mxu0 %v394
        %430 = vmatprep.subr.mxu0 0.0
        %431 = vmatpush1.msra.mxu0 %v395
        %432 = vmatprep.subr.mxu0 0.0
        %433 = vmatpush1.msra.mxu0 %v396
        %434 = vmatprep.subr.mxu0 0.0
        %435 = vmatpush1.msra.mxu0 %v397
        %436 = vmatprep.subr.mxu0 0.0
        %437 = vmatpush1.msra.mxu0 %v398
        %438 = vmatprep.subr.mxu0 0.0
        %439 = vmatpush1.msra.mxu0 0.0
        %440 = vmatprep.subr.mxu0 0.0
        %441 = vmatpush1.msra.mxu0 0.0
        %442 = vmatprep.subr.mxu0 0.0
        %443 = vmatpush1.msra.mxu0 0.0
        %444 = vmatprep.subr.mxu0 0.0
        %445 = vmatpush1.msra.mxu0 0.0
        %446 = vmatprep.subr.mxu0 0.0
        %447 = vmatpush1.msra.mxu0 0.0
        %448 = vmatprep.subr.mxu0 0.0
        %449 = vmatpush1.msra.mxu0 0.0
        %450 = vmatprep.subr.mxu0 0.0
        %451 = vmatpush1.msra.mxu0 0.0
        %452 = vmatprep.subr.mxu0 0.0
        %453 = vmatpush1.msra.mxu0 0.0
        %454 = vmatprep.subr.mxu0 0.0
        %455 = vmatpush1.msra.mxu0 0.0
        %456 = vmatprep.subr.mxu0 0.0
        %457 = vmatpush1.msra.mxu0 0.0
        %458 = vmatprep.subr.mxu0 0.0
        %459 = vmatpush1.msra.mxu0 0.0
        %460 = vmatprep.subr.mxu0 0.0
        %461 = vmatpush1.msra.mxu0 0.0
        %462 = vmatprep.subr.mxu0 0.0
        %463 = vmatpush1.msra.mxu0 0.0
        %464 = vmatprep.subr.mxu0 0.0
        %465 = vmatpush1.msra.mxu0 0.0
        %466 = vmatprep.subr.mxu0 0.0
        %467 = vmatpush1.msra.mxu0 0.0
        %468 = vmatprep.subr.mxu0 0.0
        %469 = vmatpush1.msra.mxu0 0.0
        %470 = vmatprep.mubr.f32.mxu0 0.0
        %471 = vmatmul.mubr.f32.gmra.mrb[0].mxu0 %v382
        %v472 = vpop.f32.mrb[0].mxu0
        %v473 = vadd.f32 %v404, %v472
        %v474 = vpop.f32.mrb[0].mxu0
        %475 = vdwg.mxu0
        %v476 = vmax.f32 %v473, 0.0
        %vm477 = vcmask 523264
        %v478 = vsel %vm477, %v476, 0.0
        %479 = vadd.xlane.f32.xlu0 %v478
        %v480 = vpop.xlane.xlu0 %479
        %v481 = vrcp.pop 64.0
        %v482 = vmul.f32 %v480, %v481
        %v483 = vsub.f32 %v476, %v482
        %v484 = vmul.f32 %v483, %v483
        %v485 = vsel %vm477, %v484, 0.0
        %486 = vadd.xlane.f32.xlu0 %v485
        %v487 = vpop.xlane.xlu0 %486
        %v488 = vmul.f32 %v487, %v481
        %v489 = vadd.f32 %v488, 1e-05
        %v490 = vrsqrt.pop %v489
        %v491 = vmul.f32 %v483, %v490
        %v492 = vld [vmem:[%s3] sm:$0x1]
        %v494 = vlaneseq
        %v495 = vshrl.u32 %v494, 7
        %v496 = vsub.s32 0, %v495
        %v497 = vrot.slane %v492, %v496
        %v499 = vmul.f32 %v491, %v497
        %v500 = vld [vmem:[%s4] sm:$0x1]
        %v502 = vlaneseq
        %v503 = vshrl.u32 %v502, 7
        %v504 = vsub.s32 0, %v503
        %v505 = vrot.slane %v500, %v504
        %v507 = vadd.f32 %v499, %v505
        %v508 = vld [vmem:[%s5] sm:$0xff]
        %v509 = vld [vmem:[%s5 + $0x8] sm:$0xff]
        %v510 = vld [vmem:[%s5 + $0x10] sm:$0xff]
        %v511 = vld [vmem:[%s5 + $0x18] sm:$0xff]
        %v512 = vld [vmem:[%s5 + $0x20] sm:$0xff]
        %v513 = vld [vmem:[%s5 + $0x28] sm:$0xff]
        %v514 = vld [vmem:[%s5 + $0x30] sm:$0xff]
        %v515 = vld [vmem:[%s5 + $0x38] sm:$0xff]
        %v516 = vld [vmem:[%s6] sm:$0x1]
        %v518 = vlaneseq
        %v519 = vshrl.u32 %v518, 7
        %v520 = vsub.s32 0, %v519
        %v521 = vrot.slane %v516, %v520
        %v524 = vsel %vm477, %v507, 0
        %526 = vmatprep.subr.mxu0 0.0
        %527 = vmatpush1.msra.mxu0 %v508
        %528 = vmatprep.subr.mxu0 0.0
        %529 = vmatpush1.msra.mxu0 %v509
        %530 = vmatprep.subr.mxu0 0.0
        %531 = vmatpush1.msra.mxu0 %v510
        %532 = vmatprep.subr.mxu0 0.0
        %533 = vmatpush1.msra.mxu0 %v511
        %534 = vmatprep.subr.mxu0 0.0
        %535 = vmatpush1.msra.mxu0 %v512
        %536 = vmatprep.subr.mxu0 0.0
        %537 = vmatpush1.msra.mxu0 %v513
        %538 = vmatprep.subr.mxu0 0.0
        %539 = vmatpush1.msra.mxu0 %v514
        %540 = vmatprep.subr.mxu0 0.0
        %541 = vmatpush1.msra.mxu0 %v515
        %542 = vmatprep.subr.mxu0 0.0
        %543 = vmatpush1.msra.mxu0 0.0
        %544 = vmatprep.subr.mxu0 0.0
        %545 = vmatpush1.msra.mxu0 0.0
        %546 = vmatprep.subr.mxu0 0.0
        %547 = vmatpush1.msra.mxu0 0.0
        %548 = vmatprep.subr.mxu0 0.0
        %549 = vmatpush1.msra.mxu0 0.0
        %550 = vmatprep.subr.mxu0 0.0
        %551 = vmatpush1.msra.mxu0 0.0
        %552 = vmatprep.subr.mxu0 0.0
        %553 = vmatpush1.msra.mxu0 0.0
        %554 = vmatprep.subr.mxu0 0.0
        %555 = vmatpush1.msra.mxu0 0.0
        %556 = vmatprep.subr.mxu0 0.0
        %557 = vmatpush1.msra.mxu0 0.0
        %558 = vmatprep.subr.mxu0 0.0
        %559 = vmatpush1.msra.mxu0 0.0
        %560 = vmatprep.subr.mxu0 0.0
        %561 = vmatpush1.msra.mxu0 0.0
        %562 = vmatprep.subr.mxu0 0.0
        %563 = vmatpush1.msra.mxu0 0.0
        %564 = vmatprep.subr.mxu0 0.0
        %565 = vmatpush1.msra.mxu0 0.0
        %566 = vmatprep.subr.mxu0 0.0
        %567 = vmatpush1.msra.mxu0 0.0
        %568 = vmatprep.subr.mxu0 0.0
        %569 = vmatpush1.msra.mxu0 0.0
        %570 = vmatprep.subr.mxu0 0.0
        %571 = vmatpush1.msra.mxu0 0.0
        %572 = vmatprep.subr.mxu0 0.0
        %573 = vmatpush1.msra.mxu0 0.0
        %574 = vmatprep.subr.mxu0 0.0
        %575 = vmatpush1.msra.mxu0 0.0
        %576 = vmatprep.subr.mxu0 0.0
        %577 = vmatpush1.msra.mxu0 0.0
        %578 = vmatprep.subr.mxu0 0.0
        %579 = vmatpush1.msra.mxu0 0.0
        %580 = vmatprep.subr.mxu0 0.0
        %581 = vmatpush1.msra.mxu0 0.0
        %582 = vmatprep.subr.mxu0 0.0
        %583 = vmatpush1.msra.mxu0 0.0
        %584 = vmatprep.subr.mxu0 0.0
        %585 = vmatpush1.msra.mxu0 0.0
        %586 = vmatprep.subr.mxu0 0.0
        %587 = vmatpush1.msra.mxu0 0.0
        %588 = vmatprep.subr.mxu0 0.0
        %589 = vmatpush1.msra.mxu0 0.0
        %590 = vmatprep.mubr.f32.mxu0 0.0
        %591 = vmatmul.mubr.f32.gmra.mrb[0].mxu0 %v524
        %v592 = vpop.f32.mrb[0].mxu0
        %v593 = vadd.f32 %v521, %v592
        %v594 = vpop.f32.mrb[0].mxu0
        %595 = vdwg.mxu0
        %v596 = vmax.f32 %v593, 0.0
        %v597 = vsel %vm477, %v596, 0.0
        %598 = vadd.xlane.f32.xlu0 %v597
        %v599 = vpop.xlane.xlu0 %598
        %v600 = vmul.f32 %v599, %v481
        %v601 = vsub.f32 %v596, %v600
        %v602 = vmul.f32 %v601, %v601
        %v603 = vsel %vm477, %v602, 0.0
        %604 = vadd.xlane.f32.xlu0 %v603
        %v605 = vpop.xlane.xlu0 %604
        %v606 = vmul.f32 %v605, %v481
        %v607 = vadd.f32 %v606, 1e-05
        %v608 = vrsqrt.pop %v607
        %v609 = vmul.f32 %v601, %v608
        %v610 = vld [vmem:[%s7] sm:$0x1]
        %v612 = vlaneseq
        %v613 = vshrl.u32 %v612, 7
        %v614 = vsub.s32 0, %v613
        %v615 = vrot.slane %v610, %v614
        %v617 = vmul.f32 %v609, %v615
        %v618 = vld [vmem:[%s8] sm:$0x1]
        %v620 = vlaneseq
        %v621 = vshrl.u32 %v620, 7
        %v622 = vsub.s32 0, %v621
        %v623 = vrot.slane %v618, %v622
        %v625 = vadd.f32 %v617, %v623
        %v626 = vld [vmem:[%s9] sm:$0xff]
        %v627 = vld [vmem:[%s9 + $0x8] sm:$0xff]
        %v628 = vld [vmem:[%s9 + $0x10] sm:$0xff]
        %v629 = vld [vmem:[%s9 + $0x18] sm:$0xff]
        %v630 = vld [vmem:[%s9 + $0x20] sm:$0xff]
        %v631 = vld [vmem:[%s9 + $0x28] sm:$0xff]
        %v632 = vld [vmem:[%s9 + $0x30] sm:$0xff]
        %v633 = vld [vmem:[%s9 + $0x38] sm:$0xff]
        %v634 = vld [vmem:[%s10] sm:$0x1]
        %v636 = vlaneseq
        %v637 = vshrl.u32 %v636, 7
        %v638 = vsub.s32 0, %v637
        %v639 = vrot.slane %v634, %v638
        %v642 = vsel %vm477, %v625, 0
        %644 = vmatprep.subr.mxu0 0.0
        %645 = vmatpush1.msra.mxu0 %v626
        %646 = vmatprep.subr.mxu0 0.0
        %647 = vmatpush1.msra.mxu0 %v627
        %648 = vmatprep.subr.mxu0 0.0
        %649 = vmatpush1.msra.mxu0 %v628
        %650 = vmatprep.subr.mxu0 0.0
        %651 = vmatpush1.msra.mxu0 %v629
        %652 = vmatprep.subr.mxu0 0.0
        %653 = vmatpush1.msra.mxu0 %v630
        %654 = vmatprep.subr.mxu0 0.0
        %655 = vmatpush1.msra.mxu0 %v631
        %656 = vmatprep.subr.mxu0 0.0
        %657 = vmatpush1.msra.mxu0 %v632
        %658 = vmatprep.subr.mxu0 0.0
        %659 = vmatpush1.msra.mxu0 %v633
        %660 = vmatprep.subr.mxu0 0.0
        %661 = vmatpush1.msra.mxu0 0.0
        %662 = vmatprep.subr.mxu0 0.0
        %663 = vmatpush1.msra.mxu0 0.0
        %664 = vmatprep.subr.mxu0 0.0
        %665 = vmatpush1.msra.mxu0 0.0
        %666 = vmatprep.subr.mxu0 0.0
        %667 = vmatpush1.msra.mxu0 0.0
        %668 = vmatprep.subr.mxu0 0.0
        %669 = vmatpush1.msra.mxu0 0.0
        %670 = vmatprep.subr.mxu0 0.0
        %671 = vmatpush1.msra.mxu0 0.0
        %672 = vmatprep.subr.mxu0 0.0
        %673 = vmatpush1.msra.mxu0 0.0
        %674 = vmatprep.subr.mxu0 0.0
        %675 = vmatpush1.msra.mxu0 0.0
        %676 = vmatprep.subr.mxu0 0.0
        %677 = vmatpush1.msra.mxu0 0.0
        %678 = vmatprep.subr.mxu0 0.0
        %679 = vmatpush1.msra.mxu0 0.0
        %680 = vmatprep.subr.mxu0 0.0
        %681 = vmatpush1.msra.mxu0 0.0
        %682 = vmatprep.subr.mxu0 0.0
        %683 = vmatpush1.msra.mxu0 0.0
        %684 = vmatprep.subr.mxu0 0.0
        %685 = vmatpush1.msra.mxu0 0.0
        %686 = vmatprep.subr.mxu0 0.0
        %687 = vmatpush1.msra.mxu0 0.0
        %688 = vmatprep.subr.mxu0 0.0
        %689 = vmatpush1.msra.mxu0 0.0
        %690 = vmatprep.subr.mxu0 0.0
        %691 = vmatpush1.msra.mxu0 0.0
        %692 = vmatprep.subr.mxu0 0.0
        %693 = vmatpush1.msra.mxu0 0.0
        %694 = vmatprep.subr.mxu0 0.0
        %695 = vmatpush1.msra.mxu0 0.0
        %696 = vmatprep.subr.mxu0 0.0
        %697 = vmatpush1.msra.mxu0 0.0
        %698 = vmatprep.subr.mxu0 0.0
        %699 = vmatpush1.msra.mxu0 0.0
        %700 = vmatprep.subr.mxu0 0.0
        %701 = vmatpush1.msra.mxu0 0.0
        %702 = vmatprep.subr.mxu0 0.0
        %703 = vmatpush1.msra.mxu0 0.0
        %704 = vmatprep.subr.mxu0 0.0
        %705 = vmatpush1.msra.mxu0 0.0
        %706 = vmatprep.subr.mxu0 0.0
        %707 = vmatpush1.msra.mxu0 0.0
        %708 = vmatprep.mubr.f32.mxu0 0.0
        %709 = vmatmul.mubr.f32.gmra.mrb[0].mxu0 %v642
        %v710 = vpop.f32.mrb[0].mxu0
        %v711 = vadd.f32 %v639, %v710
        %v712 = vpop.f32.mrb[0].mxu0
        %713 = vdwg.mxu0
        %714 = vst [vmem:[%s377] sm:$0xff] %v711
        %s715 = sand.u32 %s269, 1
        %s716 = scalar_lea.sflag [#allocation3], %s715
        %s717 = sand.u32 %s269, 1
        %s718 = smul.addr %s717, 8
        %s719 = scalar_lea.vmem [#allocation2], %s718
        // Predicated region
        $region65: #{tpu_custom_call.1} parent=63 // pred_check
          %p720 = pneg %p279
        $region66: #{tpu_custom_call.1} parent=63 // pred_check_branch
          %722 = sbr.rel (%p720) target = $region68
        $region67: #{tpu_custom_call.1} parent=63 // pred_region
          %s724 = ssub.s32 128, 128
          %725 = vsyncadd %s716, %s724
          %s726 = smul.addr %s25, 128
          %s727 = scalar_lea.hbm %s11, %s726
          %s729 = sshll.u32 %s719, 4
          %s730 = int_to_ptr.vmem [resolvable:$true] %s729
          %732 = dma.vmem_to_hbm [thread:$0]  %s730, 128, %s727, %s716
        $region68: #{tpu_custom_call.1} parent=63 // pred_fallthru
          _
      $region64: #{tpu_custom_call.1} parent=5 // pred_fallthru
        _
      %p733 = scmp.le.s32.totalorder 2, %s20
      // Predicated region
      $region69: #{tpu_custom_call.1} parent=5 // pred_check
        %p734 = pneg %p733
      $region70: #{tpu_custom_call.1} parent=5 // pred_check_branch
        %736 = sbr.rel (%p734) target = $region72
      $region71: #{tpu_custom_call.1} parent=5 // pred_region
        %s737 = ssub.s32 %s20, 2
        // Predicated region
        $region73: #{tpu_custom_call.1} parent=71 // pred_check
          %p738 = pneg %p285
        $region74: #{tpu_custom_call.1} parent=71 // pred_check_branch
          %740 = sbr.rel (%p738) target = $region76
        $region75: #{tpu_custom_call.1} parent=71 // pred_region
          %s741 = sand.u32 %s270, 1
          %s742 = scalar_lea.sflag [#allocation3], %s741
          %s743 = sand.u32 %s270, 1
          %s744 = smul.addr %s743, 8
          %s745 = scalar_lea.vmem [#allocation2], %s744
          %746 = dma.done %s742, 128
        $region76: #{tpu_custom_call.1} parent=71 // pred_fallthru
          _
      $region72: #{tpu_custom_call.1} parent=5 // pred_fallthru
        _
    $region6: #{tpu_custom_call.1} parent=1 // loop_footer
      %s24 = sadd.s32 1, %s20
    $region7: #{tpu_custom_call.1} parent=1 // loop_footer_branch
      %19 = sbr.rel target = $region3
    $region8: #{tpu_custom_call.1} parent=1 // loop_exit
      _
    %747 = vsyncpa [#allocation3], 1
    %s748 = scalar_lea.sflag [#allocation3], 1
    %749 = vsyncpa %s748, 1

// kernel: tpu_custom_call.1
$region0: #{tpu_custom_call.1}
  #allocation0 [shape = 'u32[]', space=smem, size = 0x4, offset = 0x4, fixed_abs, tag = 'smem constant byte address 0x4 - core index']
  #allocation1 [shape = 'u32[144,128]{1,0:T(1,128)}', space=vmem, size = 0x12000, scoped, tag = 'internal scratch']
  %s0 = inlined_call_operand.vmem [shape: f32[16,128], index: 0, kind: input, shape index: {}]
  %s1 = inlined_call_operand.vmem [shape: f32[128,64], index: 1, kind: input, shape index: {}]
  %s2 = inlined_call_operand.vmem [shape: f32[1,64], index: 2, kind: input, shape index: {}]
  %s3 = inlined_call_operand.vmem [shape: f32[1,64], index: 3, kind: input, shape index: {}]
  %s4 = inlined_call_operand.vmem [shape: f32[1,64], index: 4, kind: input, shape index: {}]
  %s5 = inlined_call_operand.vmem [shape: f32[64,64], index: 5, kind: input, shape index: {}]
  %s6 = inlined_call_operand.vmem [shape: f32[1,64], index: 6, kind: input, shape index: {}]
  %s7 = inlined_call_operand.vmem [shape: f32[1,64], index: 7, kind: input, shape index: {}]
  %s8 = inlined_call_operand.vmem [shape: f32[1,64], index: 8, kind: input, shape index: {}]
  %s9 = inlined_call_operand.vmem [shape: f32[64,128], index: 9, kind: input, shape index: {}]
  %s10 = inlined_call_operand.vmem [shape: f32[1,128], index: 10, kind: input, shape index: {}]
  %s11 = inlined_call_operand.hbm [shape: f32[16,128], index: 11, kind: output, shape index: {}]
  %s12 = sld [smem:[#allocation0]]
  $region77: #{tpu_custom_call.1} parent=0
    _
  %s14 = ssub.s32 1, %s12
  %s15 = scalar_select 0, %s14, %s12
  $region1: #{tpu_custom_call.1} parent=0
    #allocation2 [shape = 'u8[8192]{0}', space=vmem, size = 0x2000, scoped, tag = 'output window, operand 0']
    #allocation3 [shape = 's32[2]{0}', space=sflag, size = 0x8, scoped, tag = 'scoped memory for tpu_custom_call.1']
    %16 = vsyncpa [#allocation3], 0
    %s17 = scalar_lea.sflag [#allocation3], 1
    %18 = vsyncpa %s17, 0
    loop: start=0, step=1, limit=4
    $region2: #{tpu_custom_call.1} parent=1 // loop_pre_header
      _
    $region3: #{tpu_custom_call.1} parent=1 // loop_header
      %s20 = sphi 0, %s24
      %p21 = scmp.ge.s32.totalorder %s20, 4
      %s30 = sphi 0, %s32
      %s33 = sphi 0, %s30
      %s34 = sphi 0, %s33
      %s50 = sphi 0, %s34
      %s54 = sphi 0, %s54
      %s56 = sphi 0, %s54
      %s57 = sphi 0, %s56
      %s71 = sphi 0, %s57
      %s75 = sphi 0, %s75
      %s77 = sphi 0, %s75
      %s78 = sphi 0, %s77
      %s92 = sphi 0, %s78
      %s96 = sphi 0, %s96
      %s98 = sphi 0, %s96
      %s99 = sphi 0, %s98
      %s113 = sphi 0, %s99
      %s117 = sphi 0, %s117
      %s119 = sphi 0, %s117
      %s120 = sphi 0, %s119
      %s134 = sphi 0, %s120
      %s138 = sphi 0, %s138
      %s140 = sphi 0, %s138
      %s141 = sphi 0, %s140
      %s155 = sphi 0, %s141
      %s159 = sphi 0, %s159
      %s161 = sphi 0, %s159
      %s162 = sphi 0, %s161
      %s176 = sphi 0, %s162
      %s180 = sphi 0, %s180
      %s182 = sphi 0, %s180
      %s183 = sphi 0, %s182
      %s197 = sphi 0, %s183
      %s201 = sphi 0, %s201
      %s203 = sphi 0, %s201
      %s204 = sphi 0, %s203
      %s218 = sphi 0, %s204
      %s222 = sphi 0, %s222
      %s224 = sphi 0, %s222
      %s225 = sphi 0, %s224
      %s239 = sphi 0, %s225
      %s243 = sphi 0, %s243
      %s245 = sphi 0, %s243
      %s246 = sphi 0, %s245
      %s260 = sphi 0, %s246
      %s266 = sphi 0, %s268
      %s269 = sphi 0, %s266
      %s270 = sphi 0, %s269
      %s286 = sphi 0, %s270
    $region4: #{tpu_custom_call.1} parent=1 // loop_header_branch
      %23 = sbr.rel (%p21) target = $region8
    $region5: #{tpu_custom_call.1} parent=1 // loop_body
      %s25 = ssub.s32 %s20, 1
      %s26 = ssub.s32 %s20, 2
      %s27 = sadd.s32 %s20, 1
      %s28 = ssub.s32 %s20, %s27
      %p29 = scmp.eq.s32.totalorder %s28, 0
      %s31 = sadd.s32 %s30, 1
      %s32 = scalar_select %p29, %s30, %s31
      %p35 = pneg %p29
      %p36 = scmp.eq.s32.totalorder %s20, 1
      %p37 = por %p35, %p36
      %p38 = scmp.ne.s32.totalorder %s30, %s33
      %p39 = scmp.eq.s32.totalorder %s20, 0
      %p40 = por %p38, %p39
      %p41 = scmp.ne.s32.totalorder %s30, %s33
      %p42 = scmp.eq.s32.totalorder %s25, 1
      %p43 = por %p41, %p42
      %p44 = scmp.ne.s32.totalorder %s33, %s34
      %p45 = scmp.eq.s32.totalorder %s25, 0
      %p46 = por %p44, %p45
      %p47 = scmp.ne.s32.totalorder %s33, %s34
      %p48 = scmp.eq.s32.totalorder %s26, 1
      %p49 = por %p47, %p48
      %p51 = scmp.ne.s32.totalorder %s34, %s50
      %p52 = scmp.eq.s32.totalorder %s26, 0
      %p53 = por %p51, %p52
      %s55 = sadd.s32 %s54, 1
      %p58 = scmp.eq.s32.totalorder %s20, 1
      %p59 = scmp.ne.s32.totalorder %s54, %s56
      %p60 = scmp.eq.s32.totalorder %s20, 0
      %p61 = por %p59, %p60
      %p62 = scmp.ne.s32.totalorder %s54, %s56
      %p63 = scmp.eq.s32.totalorder %s25, 1
      %p64 = por %p62, %p63
      %p65 = scmp.ne.s32.totalorder %s56, %s57
      %p66 = scmp.eq.s32.totalorder %s25, 0
      %p67 = por %p65, %p66
      %p68 = scmp.ne.s32.totalorder %s56, %s57
      %p69 = scmp.eq.s32.totalorder %s26, 1
      %p70 = por %p68, %p69
      %p72 = scmp.ne.s32.totalorder %s57, %s71
      %p73 = scmp.eq.s32.totalorder %s26, 0
      %p74 = por %p72, %p73
      %s76 = sadd.s32 %s75, 1
      %p79 = scmp.eq.s32.totalorder %s20, 1
      %p80 = scmp.ne.s32.totalorder %s75, %s77
      %p81 = scmp.eq.s32.totalorder %s20, 0
      %p82 = por %p80, %p81
      %p83 = scmp.ne.s32.totalorder %s75, %s77
      %p84 = scmp.eq.s32.totalorder %s25, 1
      %p85 = por %p83, %p84
      %p86 = scmp.ne.s32.totalorder %s77, %s78
      %p87 = scmp.eq.s32.totalorder %s25, 0
      %p88 = por %p86, %p87
      %p89 = scmp.ne.s32.totalorder %s77, %s78
      %p90 = scmp.eq.s32.totalorder %s26, 1
      %p91 = por %p89, %p90
      %p93 = scmp.ne.s32.totalorder %s78, %s92
      %p94 = scmp.eq.s32.totalorder %s26, 0
      %p95 = por %p93, %p94
      %s97 = sadd.s32 %s96, 1
      %p100 = scmp.eq.s32.totalorder %s20, 1
      %p101 = scmp.ne.s32.totalorder %s96, %s98
      %p102 = scmp.eq.s32.totalorder %s20, 0
      %p103 = por %p101, %p102
      %p104 = scmp.ne.s32.totalorder %s96, %s98
      %p105 = scmp.eq.s32.totalorder %s25, 1
      %p106 = por %p104, %p105
      %p107 = scmp.ne.s32.totalorder %s98, %s99
      %p108 = scmp.eq.s32.totalorder %s25, 0
      %p109 = por %p107, %p108
      %p110 = scmp.ne.s32.totalorder %s98, %s99
      %p111 = scmp.eq.s32.totalorder %s26, 1
      %p112 = por %p110, %p111
      %p114 = scmp.ne.s32.totalorder %s99, %s113
      %p115 = scmp.eq.s32.totalorder %s26, 0
      %p116 = por %p114, %p115
      %s118 = sadd.s32 %s117, 1
      %p121 = scmp.eq.s32.totalorder %s20, 1
      %p122 = scmp.ne.s32.totalorder %s117, %s119
      %p123 = scmp.eq.s32.totalorder %s20, 0
      %p124 = por %p122, %p123
      %p125 = scmp.ne.s32.totalorder %s117, %s119
      %p126 = scmp.eq.s32.totalorder %s25, 1
      %p127 = por %p125, %p126
      %p128 = scmp.ne.s32.totalorder %s119, %s120
      %p129 = scmp.eq.s32.totalorder %s25, 0
      %p130 = por %p128, %p129
      %p131 = scmp.ne.s32.totalorder %s119, %s120
      %p132 = scmp.eq.s32.totalorder %s26, 1
      %p133 = por %p131, %p132
      %p135 = scmp.ne.s32.totalorder %s120, %s134
      %p136 = scmp.eq.s32.totalorder %s26, 0
      %p137 = por %p135, %p136
      %s139 = sadd.s32 %s138, 1
      %p142 = scmp.eq.s32.totalorder %s20, 1
      %p143 = scmp.ne.s32.totalorder %s138, %s140
      %p144 = scmp.eq.s32.totalorder %s20, 0
      %p145 = por %p143, %p144
      %p146 = scmp.ne.s32.totalorder %s138, %s140
      %p147 = scmp.eq.s32.totalorder %s25, 1
      %p148 = por %p146, %p147
      %p149 = scmp.ne.s32.totalorder %s140, %s141
      %p150 = scmp.eq.s32.totalorder %s25, 0
      %p151 = por %p149, %p150
      %p152 = scmp.ne.s32.totalorder %s140, %s141
      %p153 = scmp.eq.s32.totalorder %s26, 1
      %p154 = por %p152, %p153
      %p156 = scmp.ne.s32.totalorder %s141, %s155
      %p157 = scmp.eq.s32.totalorder %s26, 0
      %p158 = por %p156, %p157
      %s160 = sadd.s32 %s159, 1
      %p163 = scmp.eq.s32.totalorder %s20, 1
      %p164 = scmp.ne.s32.totalorder %s159, %s161
      %p165 = scmp.eq.s32.totalorder %s20, 0
      %p166 = por %p164, %p165
      %p167 = scmp.ne.s32.totalorder %s159, %s161
      %p168 = scmp.eq.s32.totalorder %s25, 1
      %p169 = por %p167, %p168
      %p170 = scmp.ne.s32.totalorder %s161, %s162
      %p171 = scmp.eq.s32.totalorder %s25, 0
      %p172 = por %p170, %p171
      %p173 = scmp.ne.s32.totalorder %s161, %s162
      %p174 = scmp.eq.s32.totalorder %s26, 1
      %p175 = por %p173, %p174
      %p177 = scmp.ne.s32.totalorder %s162, %s176
      %p178 = scmp.eq.s32.totalorder %s26, 0
      %p179 = por %p177, %p178
      %s181 = sadd.s32 %s180, 1
      %p184 = scmp.eq.s32.totalorder %s20, 1
      %p185 = scmp.ne.s32.totalorder %s180, %s182
      %p186 = scmp.eq.s32.totalorder %s20, 0
      %p187 = por %p185, %p186
      %p188 = scmp.ne.s32.totalorder %s180, %s182
      %p189 = scmp.eq.s32.totalorder %s25, 1
      %p190 = por %p188, %p189
      %p191 = scmp.ne.s32.totalorder %s182, %s183
      %p192 = scmp.eq.s32.totalorder %s25, 0
      %p193 = por %p191, %p192
      %p194 = scmp.ne.s32.totalorder %s182, %s183
      %p195 = scmp.eq.s32.totalorder %s26, 1
      %p196 = por %p194, %p195
      %p198 = scmp.ne.s32.totalorder %s183, %s197
      %p199 = scmp.eq.s32.totalorder %s26, 0
      %p200 = por %p198, %p199
      %s202 = sadd.s32 %s201, 1
      %p205 = scmp.eq.s32.totalorder %s20, 1
      %p206 = scmp.ne.s32.totalorder %s201, %s203
      %p207 = scmp.eq.s32.totalorder %s20, 0
      %p208 = por %p206, %p207
      %p209 = scmp.ne.s32.totalorder %s201, %s203
      %p210 = scmp.eq.s32.totalorder %s25, 1
      %p211 = por %p209, %p210
      %p212 = scmp.ne.s32.totalorder %s203, %s204
      %p213 = scmp.eq.s32.totalorder %s25, 0
      %p214 = por %p212, %p213
      %p215 = scmp.ne.s32.totalorder %s203, %s204
      %p216 = scmp.eq.s32.totalorder %s26, 1
      %p217 = por %p215, %p216
      %p219 = scmp.ne.s32.totalorder %s204, %s218
      %p220 = scmp.eq.s32.totalorder %s26, 0
      %p221 = por %p219, %p220
      %s223 = sadd.s32 %s222, 1
      %p226 = scmp.eq.s32.totalorder %s20, 1
      %p227 = scmp.ne.s32.totalorder %s222, %s224
      %p228 = scmp.eq.s32.totalorder %s20, 0
      %p229 = por %p227, %p228
      %p230 = scmp.ne.s32.totalorder %s222, %s224
      %p231 = scmp.eq.s32.totalorder %s25, 1
      %p232 = por %p230, %p231
      %p233 = scmp.ne.s32.totalorder %s224, %s225
      %p234 = scmp.eq.s32.totalorder %s25, 0
      %p235 = por %p233, %p234
      %p236 = scmp.ne.s32.totalorder %s224, %s225
      %p237 = scmp.eq.s32.totalorder %s26, 1
      %p238 = por %p236, %p237
      %p240 = scmp.ne.s32.totalorder %s225, %s239
      %p241 = scmp.eq.s32.totalorder %s26, 0
      %p242 = por %p240, %p241
      %s244 = sadd.s32 %s243, 1
      %p247 = scmp.eq.s32.totalorder %s20, 1
      %p248 = scmp.ne.s32.totalorder %s243, %s245
      %p249 = scmp.eq.s32.totalorder %s20, 0
      %p250 = por %p248, %p249
      %p251 = scmp.ne.s32.totalorder %s243, %s245
      %p252 = scmp.eq.s32.totalorder %s25, 1
      %p253 = por %p251, %p252
      %p254 = scmp.ne.s32.totalorder %s245, %s246
      %p255 = scmp.eq.s32.totalorder %s25, 0
      %p256 = por %p254, %p255
      %p257 = scmp.ne.s32.totalorder %s245, %s246
      %p258 = scmp.eq.s32.totalorder %s26, 1
      %p259 = por %p257, %p258
      %p261 = scmp.ne.s32.totalorder %s246, %s260
      %p262 = scmp.eq.s32.totalorder %s26, 0
      %p263 = por %p261, %p262
      %s264 = ssub.s32 %s20, %s27
      %p265 = scmp.eq.s32.totalorder %s264, 0
      %s267 = sadd.s32 %s266, 1
      %s268 = scalar_select %p265, %s266, %s267
      %p271 = pneg %p265
      %p272 = scmp.eq.s32.totalorder %s20, 1
      %p273 = por %p271, %p272
      %p274 = scmp.ne.s32.totalorder %s266, %s269
      %p275 = scmp.eq.s32.totalorder %s20, 0
      %p276 = por %p274, %p275
      %p277 = scmp.ne.s32.totalorder %s266, %s269
      %p278 = scmp.eq.s32.totalorder %s25, 1
      %p279 = por %p277, %p278
      %p280 = scmp.ne.s32.totalorder %s269, %s270
      %p281 = scmp.eq.s32.totalorder %s25, 0
      %p282 = por %p280, %p281
      %p283 = scmp.ne.s32.totalorder %s269, %s270
      %p284 = scmp.eq.s32.totalorder %s26, 1
      %p285 = por %p283, %p284
      %p287 = scmp.ne.s32.totalorder %s270, %s286
      %p288 = scmp.eq.s32.totalorder %s26, 0
      %p289 = por %p287, %p288
      %p290 = scmp.le.s32.totalorder 1, %s20
      %p291 = scmp.lt.s32.totalorder %s20, 3
      %p292 = pnand %p290, %p291
      %p293 = pneg %p292
      // Predicated region
      $region9: #{tpu_custom_call.1} parent=5 // pred_check
        _
      $region10: #{tpu_custom_call.1} parent=5 // pred_check_branch
        %295 = sbr.rel (%p292) target = $region12
      $region11: #{tpu_custom_call.1} parent=5 // pred_region
        %s296 = ssub.s32 %s20, 1
        // Predicated region
        $region13: #{tpu_custom_call.1} parent=11 // pred_check
          %p297 = pneg %p67
        $region14: #{tpu_custom_call.1} parent=11 // pred_check_branch
          %299 = sbr.rel (%p297) target = $region16
        $region15: #{tpu_custom_call.1} parent=11 // pred_region
          _
        $region16: #{tpu_custom_call.1} parent=11 // pred_fallthru
          _
        // Predicated region
        $region17: #{tpu_custom_call.1} parent=11 // pred_check
          %p300 = pneg %p88
        $region18: #{tpu_custom_call.1} parent=11 // pred_check_branch
          %302 = sbr.rel (%p300) target = $region20
        $region19: #{tpu_custom_call.1} parent=11 // pred_region
          _
        $region20: #{tpu_custom_call.1} parent=11 // pred_fallthru
          _
        // Predicated region
        $region21: #{tpu_custom_call.1} parent=11 // pred_check
          %p303 = pneg %p109
        $region22: #{tpu_custom_call.1} parent=11 // pred_check_branch
          %305 = sbr.rel (%p303) target = $region24
        $region23: #{tpu_custom_call.1} parent=11 // pred_region
          _
        $region24: #{tpu_custom_call.1} parent=11 // pred_fallthru
          _
        // Predicated region
        $region25: #{tpu_custom_call.1} parent=11 // pred_check
          %p306 = pneg %p130
        $region26: #{tpu_custom_call.1} parent=11 // pred_check_branch
          %308 = sbr.rel (%p306) target = $region28
        $region27: #{tpu_custom_call.1} parent=11 // pred_region
          _
        $region28: #{tpu_custom_call.1} parent=11 // pred_fallthru
          _
        // Predicated region
        $region29: #{tpu_custom_call.1} parent=11 // pred_check
          %p309 = pneg %p151
        $region30: #{tpu_custom_call.1} parent=11 // pred_check_branch
          %311 = sbr.rel (%p309) target = $region32
        $region31: #{tpu_custom_call.1} parent=11 // pred_region
          _
        $region32: #{tpu_custom_call.1} parent=11 // pred_fallthru
          _
        // Predicated region
        $region33: #{tpu_custom_call.1} parent=11 // pred_check
          %p312 = pneg %p172
        $region34: #{tpu_custom_call.1} parent=11 // pred_check_branch
          %314 = sbr.rel (%p312) target = $region36
        $region35: #{tpu_custom_call.1} parent=11 // pred_region
          _
        $region36: #{tpu_custom_call.1} parent=11 // pred_fallthru
          _
        // Predicated region
        $region37: #{tpu_custom_call.1} parent=11 // pred_check
          %p315 = pneg %p193
        $region38: #{tpu_custom_call.1} parent=11 // pred_check_branch
          %317 = sbr.rel (%p315) target = $region40
        $region39: #{tpu_custom_call.1} parent=11 // pred_region
          _
        $region40: #{tpu_custom_call.1} parent=11 // pred_fallthru
          _
        // Predicated region
        $region41: #{tpu_custom_call.1} parent=11 // pred_check
          %p318 = pneg %p214
        $region42: #{tpu_custom_call.1} parent=11 // pred_check_branch
          %320 = sbr.rel (%p318) target = $region44
        $region43: #{tpu_custom_call.1} parent=11 // pred_region
          _
        $region44: #{tpu_custom_call.1} parent=11 // pred_fallthru
          _
        // Predicated region
        $region45: #{tpu_custom_call.1} parent=11 // pred_check
          %p321 = pneg %p235
        $region46: #{tpu_custom_call.1} parent=11 // pred_check_branch
          %323 = sbr.rel (%p321) target = $region48
        $region47: #{tpu_custom_call.1} parent=11 // pred_region
          _
        $region48: #{tpu_custom_call.1} parent=11 // pred_fallthru
          _
        // Predicated region
        $region49: #{tpu_custom_call.1} parent=11 // pred_check
          %p324 = pneg %p256
        $region50: #{tpu_custom_call.1} parent=11 // pred_check_branch
          %326 = sbr.rel (%p324) target = $region52
        $region51: #{tpu_custom_call.1} parent=11 // pred_region
          _
        $region52: #{tpu_custom_call.1} parent=11 // pred_fallthru
          _
      $region12: #{tpu_custom_call.1} parent=5 // pred_fallthru
        _
      %p327 = scmp.lt.s32.totalorder %s20, 2
      // Predicated region
      $region53: #{tpu_custom_call.1} parent=5 // pred_check
        %p328 = pneg %p327
      $region54: #{tpu_custom_call.1} parent=5 // pred_check_branch
        %330 = sbr.rel (%p328) target = $region56
      $region55: #{tpu_custom_call.1} parent=5 // pred_region
        // Predicated region
        $region57: #{tpu_custom_call.1} parent=55 // pred_check
          %p331 = pneg %p40
        $region58: #{tpu_custom_call.1} parent=55 // pred_check_branch
          %333 = sbr.rel (%p331) target = $region60
        $region59: #{tpu_custom_call.1} parent=55 // pred_region
          %p334 = scmp.lt.s32.totalorder %s20, 1
          %s335 = scalar_select %p334, %s20, 1
          %s336 = smul.addr %s335, 8
          %s337 = scalar_lea.vmem %s0, %s336
        $region60: #{tpu_custom_call.1} parent=55 // pred_fallthru
          _
      $region56: #{tpu_custom_call.1} parent=5 // pred_fallthru
        _
      %p338 = scmp.le.s32.totalorder 1, %s20
      %p339 = scmp.lt.s32.totalorder %s20, 3
      %p340 = pnand %p338, %p339
      %p341 = pneg %p340
      // Predicated region
      $region61: #{tpu_custom_call.1} parent=5 // pred_check
        _
      $region62: #{tpu_custom_call.1} parent=5 // pred_check_branch
        %343 = sbr.rel (%p340) target = $region64
      $region63: #{tpu_custom_call.1} parent=5 // pred_region
        %s344 = ssub.s32 %s20, 1
        %p345 = scmp.lt.s32.totalorder %s25, 1
        %s346 = scalar_select %p345, %s25, 1
        %s347 = smul.addr %s346, 8
        %s348 = scalar_lea.vmem %s0, %s347
        %p349 = pneg %p46
        %p350 = pneg %p43
        %p351 = pneg %p67
        %p352 = pneg %p64
        %p353 = pneg %p88
        %p354 = pneg %p85
        %p355 = pneg %p109
        %p356 = pneg %p106
        %p357 = pneg %p130
        %p358 = pneg %p127
        %p359 = pneg %p151
        %p360 = pneg %p148
        %p361 = pneg %p172
        %p362 = pneg %p169
        %p363 = pneg %p193
        %p364 = pneg %p190
        %p365 = pneg %p214
        %p366 = pneg %p211
        %p367 = pneg %p235
        %p368 = pneg %p232
        %p369 = pneg %p256
        %p370 = pneg %p253
        %p371 = pneg %p282
        %p372 = pneg %p279
        %s373 = sand.u32 %s269, 1
        %s374 = scalar_lea.sflag [#allocation3], %s373
        %s375 = sand.u32 %s269, 1
        %s376 = smul.addr %s375, 8
        %s377 = scalar_lea.vmem [#allocation2], %s376
        %p378 = scmp.lt.s32.totalorder %s25, 1
        %s379 = scalar_select %p378, %s25, 1
        %s380 = smul.addr %s379, 8
        %s381 = scalar_lea.vmem %s0, %s380
        %v382 = vld [vmem:[%s381] sm:$0xff]
        %v383 = vld [vmem:[%s1] sm:$0xff]
        %v384 = vld [vmem:[%s1 + $0x8] sm:$0xff]
        %v385 = vld [vmem:[%s1 + $0x10] sm:$0xff]
        %v386 = vld [vmem:[%s1 + $0x18] sm:$0xff]
        %v387 = vld [vmem:[%s1 + $0x20] sm:$0xff]
        %v388 = vld [vmem:[%s1 + $0x28] sm:$0xff]
        %v389 = vld [vmem:[%s1 + $0x30] sm:$0xff]
        %v390 = vld [vmem:[%s1 + $0x38] sm:$0xff]
        %v391 = vld [vmem:[%s1 + $0x40] sm:$0xff]
        %v392 = vld [vmem:[%s1 + $0x48] sm:$0xff]
        %v393 = vld [vmem:[%s1 + $0x50] sm:$0xff]
        %v394 = vld [vmem:[%s1 + $0x58] sm:$0xff]
        %v395 = vld [vmem:[%s1 + $0x60] sm:$0xff]
        %v396 = vld [vmem:[%s1 + $0x68] sm:$0xff]
        %v397 = vld [vmem:[%s1 + $0x70] sm:$0xff]
        %v398 = vld [vmem:[%s1 + $0x78] sm:$0xff]
        %v399 = vld [vmem:[%s2] sm:$0x1]
        %v401 = vlaneseq
        %v402 = vshrl.u32 %v401, 7
        %v403 = vsub.s32 0, %v402
        %v404 = vrot.slane %v399, %v403
        %406 = vmatprep.subr.mxu0 0.0
        %407 = vmatpush1.msra.mxu0 %v383
        %408 = vmatprep.subr.mxu0 0.0
        %409 = vmatpush1.msra.mxu0 %v384
        %410 = vmatprep.subr.mxu0 0.0
        %411 = vmatpush1.msra.mxu0 %v385
        %412 = vmatprep.subr.mxu0 0.0
        %413 = vmatpush1.msra.mxu0 %v386
        %414 = vmatprep.subr.mxu0 0.0
        %415 = vmatpush1.msra.mxu0 %v387
        %416 = vmatprep.subr.mxu0 0.0
        %417 = vmatpush1.msra.mxu0 %v388
        %418 = vmatprep.subr.mxu0 0.0
        %419 = vmatpush1.msra.mxu0 %v389
        %420 = vmatprep.subr.mxu0 0.0
        %421 = vmatpush1.msra.mxu0 %v390
        %422 = vmatprep.subr.mxu0 0.0
        %423 = vmatpush1.msra.mxu0 %v391
        %424 = vmatprep.subr.mxu0 0.0
        %425 = vmatpush1.msra.mxu0 %v392
        %426 = vmatprep.subr.mxu0 0.0
        %427 = vmatpush1.msra.mxu0 %v393
        %428 = vmatprep.subr.mxu0 0.0
        %429 = vmatpush1.msra.mxu0 %v394
        %430 = vmatprep.subr.mxu0 0.0
        %431 = vmatpush1.msra.mxu0 %v395
        %432 = vmatprep.subr.mxu0 0.0
        %433 = vmatpush1.msra.mxu0 %v396
        %434 = vmatprep.subr.mxu0 0.0
        %435 = vmatpush1.msra.mxu0 %v397
        %436 = vmatprep.subr.mxu0 0.0
        %437 = vmatpush1.msra.mxu0 %v398
        %438 = vmatprep.subr.mxu0 0.0
        %439 = vmatpush1.msra.mxu0 0.0
        %440 = vmatprep.subr.mxu0 0.0
        %441 = vmatpush1.msra.mxu0 0.0
        %442 = vmatprep.subr.mxu0 0.0
        %443 = vmatpush1.msra.mxu0 0.0
        %444 = vmatprep.subr.mxu0 0.0
        %445 = vmatpush1.msra.mxu0 0.0
        %446 = vmatprep.subr.mxu0 0.0
        %447 = vmatpush1.msra.mxu0 0.0
        %448 = vmatprep.subr.mxu0 0.0
        %449 = vmatpush1.msra.mxu0 0.0
        %450 = vmatprep.subr.mxu0 0.0
        %451 = vmatpush1.msra.mxu0 0.0
        %452 = vmatprep.subr.mxu0 0.0
        %453 = vmatpush1.msra.mxu0 0.0
        %454 = vmatprep.subr.mxu0 0.0
        %455 = vmatpush1.msra.mxu0 0.0
        %456 = vmatprep.subr.mxu0 0.0
        %457 = vmatpush1.msra.mxu0 0.0
        %458 = vmatprep.subr.mxu0 0.0
        %459 = vmatpush1.msra.mxu0 0.0
        %460 = vmatprep.subr.mxu0 0.0
        %461 = vmatpush1.msra.mxu0 0.0
        %462 = vmatprep.subr.mxu0 0.0
        %463 = vmatpush1.msra.mxu0 0.0
        %464 = vmatprep.subr.mxu0 0.0
        %465 = vmatpush1.msra.mxu0 0.0
        %466 = vmatprep.subr.mxu0 0.0
        %467 = vmatpush1.msra.mxu0 0.0
        %468 = vmatprep.subr.mxu0 0.0
        %469 = vmatpush1.msra.mxu0 0.0
        %470 = vmatprep.mubr.f32.mxu0 0.0
        %471 = vmatmul.mubr.f32.gmra.mrb[0].mxu0 %v382
        %v472 = vpop.f32.mrb[0].mxu0
        %v473 = vadd.f32 %v404, %v472
        %v474 = vpop.f32.mrb[0].mxu0
        %475 = vdwg.mxu0
        %v476 = vmax.f32 %v473, 0.0
        %vm477 = vcmask 523264
        %v478 = vsel %vm477, %v476, 0.0
        %479 = vadd.xlane.f32.xlu0 %v478
        %v480 = vpop.xlane.xlu0 %479
        %v481 = vrcp.pop 64.0
        %v482 = vmul.f32 %v480, %v481
        %v483 = vsub.f32 %v476, %v482
        %v484 = vmul.f32 %v483, %v483
        %v485 = vsel %vm477, %v484, 0.0
        %486 = vadd.xlane.f32.xlu0 %v485
        %v487 = vpop.xlane.xlu0 %486
        %v488 = vmul.f32 %v487, %v481
        %v489 = vadd.f32 %v488, 1e-05
        %v490 = vrsqrt.pop %v489
        %v491 = vmul.f32 %v483, %v490
        %v492 = vld [vmem:[%s3] sm:$0x1]
        %v494 = vlaneseq
        %v495 = vshrl.u32 %v494, 7
        %v496 = vsub.s32 0, %v495
        %v497 = vrot.slane %v492, %v496
        %v499 = vmul.f32 %v491, %v497
        %v500 = vld [vmem:[%s4] sm:$0x1]
        %v502 = vlaneseq
        %v503 = vshrl.u32 %v502, 7
        %v504 = vsub.s32 0, %v503
        %v505 = vrot.slane %v500, %v504
        %v507 = vadd.f32 %v499, %v505
        %v508 = vld [vmem:[%s5] sm:$0xff]
        %v509 = vld [vmem:[%s5 + $0x8] sm:$0xff]
        %v510 = vld [vmem:[%s5 + $0x10] sm:$0xff]
        %v511 = vld [vmem:[%s5 + $0x18] sm:$0xff]
        %v512 = vld [vmem:[%s5 + $0x20] sm:$0xff]
        %v513 = vld [vmem:[%s5 + $0x28] sm:$0xff]
        %v514 = vld [vmem:[%s5 + $0x30] sm:$0xff]
        %v515 = vld [vmem:[%s5 + $0x38] sm:$0xff]
        %v516 = vld [vmem:[%s6] sm:$0x1]
        %v518 = vlaneseq
        %v519 = vshrl.u32 %v518, 7
        %v520 = vsub.s32 0, %v519
        %v521 = vrot.slane %v516, %v520
        %v524 = vsel %vm477, %v507, 0
        %526 = vmatprep.subr.mxu0 0.0
        %527 = vmatpush1.msra.mxu0 %v508
        %528 = vmatprep.subr.mxu0 0.0
        %529 = vmatpush1.msra.mxu0 %v509
        %530 = vmatprep.subr.mxu0 0.0
        %531 = vmatpush1.msra.mxu0 %v510
        %532 = vmatprep.subr.mxu0 0.0
        %533 = vmatpush1.msra.mxu0 %v511
        %534 = vmatprep.subr.mxu0 0.0
        %535 = vmatpush1.msra.mxu0 %v512
        %536 = vmatprep.subr.mxu0 0.0
        %537 = vmatpush1.msra.mxu0 %v513
        %538 = vmatprep.subr.mxu0 0.0
        %539 = vmatpush1.msra.mxu0 %v514
        %540 = vmatprep.subr.mxu0 0.0
        %541 = vmatpush1.msra.mxu0 %v515
        %542 = vmatprep.subr.mxu0 0.0
        %543 = vmatpush1.msra.mxu0 0.0
        %544 = vmatprep.subr.mxu0 0.0
        %545 = vmatpush1.msra.mxu0 0.0
        %546 = vmatprep.subr.mxu0 0.0
        %547 = vmatpush1.msra.mxu0 0.0
        %548 = vmatprep.subr.mxu0 0.0
        %549 = vmatpush1.msra.mxu0 0.0
        %550 = vmatprep.subr.mxu0 0.0
        %551 = vmatpush1.msra.mxu0 0.0
        %552 = vmatprep.subr.mxu0 0.0
        %553 = vmatpush1.msra.mxu0 0.0
        %554 = vmatprep.subr.mxu0 0.0
        %555 = vmatpush1.msra.mxu0 0.0
        %556 = vmatprep.subr.mxu0 0.0
        %557 = vmatpush1.msra.mxu0 0.0
        %558 = vmatprep.subr.mxu0 0.0
        %559 = vmatpush1.msra.mxu0 0.0
        %560 = vmatprep.subr.mxu0 0.0
        %561 = vmatpush1.msra.mxu0 0.0
        %562 = vmatprep.subr.mxu0 0.0
        %563 = vmatpush1.msra.mxu0 0.0
        %564 = vmatprep.subr.mxu0 0.0
        %565 = vmatpush1.msra.mxu0 0.0
        %566 = vmatprep.subr.mxu0 0.0
        %567 = vmatpush1.msra.mxu0 0.0
        %568 = vmatprep.subr.mxu0 0.0
        %569 = vmatpush1.msra.mxu0 0.0
        %570 = vmatprep.subr.mxu0 0.0
        %571 = vmatpush1.msra.mxu0 0.0
        %572 = vmatprep.subr.mxu0 0.0
        %573 = vmatpush1.msra.mxu0 0.0
        %574 = vmatprep.subr.mxu0 0.0
        %575 = vmatpush1.msra.mxu0 0.0
        %576 = vmatprep.subr.mxu0 0.0
        %577 = vmatpush1.msra.mxu0 0.0
        %578 = vmatprep.subr.mxu0 0.0
        %579 = vmatpush1.msra.mxu0 0.0
        %580 = vmatprep.subr.mxu0 0.0
        %581 = vmatpush1.msra.mxu0 0.0
        %582 = vmatprep.subr.mxu0 0.0
        %583 = vmatpush1.msra.mxu0 0.0
        %584 = vmatprep.subr.mxu0 0.0
        %585 = vmatpush1.msra.mxu0 0.0
        %586 = vmatprep.subr.mxu0 0.0
        %587 = vmatpush1.msra.mxu0 0.0
        %588 = vmatprep.subr.mxu0 0.0
        %589 = vmatpush1.msra.mxu0 0.0
        %590 = vmatprep.mubr.f32.mxu0 0.0
        %591 = vmatmul.mubr.f32.gmra.mrb[0].mxu0 %v524
        %v592 = vpop.f32.mrb[0].mxu0
        %v593 = vadd.f32 %v521, %v592
        %v594 = vpop.f32.mrb[0].mxu0
        %595 = vdwg.mxu0
        %v596 = vmax.f32 %v593, 0.0
        %v597 = vsel %vm477, %v596, 0.0
        %598 = vadd.xlane.f32.xlu0 %v597
        %v599 = vpop.xlane.xlu0 %598
        %v600 = vmul.f32 %v599, %v481
        %v601 = vsub.f32 %v596, %v600
        %v602 = vmul.f32 %v601, %v601
        %v603 = vsel %vm477, %v602, 0.0
        %604 = vadd.xlane.f32.xlu0 %v603
        %v605 = vpop.xlane.xlu0 %604
        %v606 = vmul.f32 %v605, %v481
        %v607 = vadd.f32 %v606, 1e-05
        %v608 = vrsqrt.pop %v607
        %v609 = vmul.f32 %v601, %v608
        %v610 = vld [vmem:[%s7] sm:$0x1]
        %v612 = vlaneseq
        %v613 = vshrl.u32 %v612, 7
        %v614 = vsub.s32 0, %v613
        %v615 = vrot.slane %v610, %v614
        %v617 = vmul.f32 %v609, %v615
        %v618 = vld [vmem:[%s8] sm:$0x1]
        %v620 = vlaneseq
        %v621 = vshrl.u32 %v620, 7
        %v622 = vsub.s32 0, %v621
        %v623 = vrot.slane %v618, %v622
        %v625 = vadd.f32 %v617, %v623
        %v626 = vld [vmem:[%s9] sm:$0xff]
        %v627 = vld [vmem:[%s9 + $0x8] sm:$0xff]
        %v628 = vld [vmem:[%s9 + $0x10] sm:$0xff]
        %v629 = vld [vmem:[%s9 + $0x18] sm:$0xff]
        %v630 = vld [vmem:[%s9 + $0x20] sm:$0xff]
        %v631 = vld [vmem:[%s9 + $0x28] sm:$0xff]
        %v632 = vld [vmem:[%s9 + $0x30] sm:$0xff]
        %v633 = vld [vmem:[%s9 + $0x38] sm:$0xff]
        %v634 = vld [vmem:[%s10] sm:$0x1]
        %v636 = vlaneseq
        %v637 = vshrl.u32 %v636, 7
        %v638 = vsub.s32 0, %v637
        %v639 = vrot.slane %v634, %v638
        %v642 = vsel %vm477, %v625, 0
        %644 = vmatprep.subr.mxu0 0.0
        %645 = vmatpush1.msra.mxu0 %v626
        %646 = vmatprep.subr.mxu0 0.0
        %647 = vmatpush1.msra.mxu0 %v627
        %648 = vmatprep.subr.mxu0 0.0
        %649 = vmatpush1.msra.mxu0 %v628
        %650 = vmatprep.subr.mxu0 0.0
        %651 = vmatpush1.msra.mxu0 %v629
        %652 = vmatprep.subr.mxu0 0.0
        %653 = vmatpush1.msra.mxu0 %v630
        %654 = vmatprep.subr.mxu0 0.0
        %655 = vmatpush1.msra.mxu0 %v631
        %656 = vmatprep.subr.mxu0 0.0
        %657 = vmatpush1.msra.mxu0 %v632
        %658 = vmatprep.subr.mxu0 0.0
        %659 = vmatpush1.msra.mxu0 %v633
        %660 = vmatprep.subr.mxu0 0.0
        %661 = vmatpush1.msra.mxu0 0.0
        %662 = vmatprep.subr.mxu0 0.0
        %663 = vmatpush1.msra.mxu0 0.0
        %664 = vmatprep.subr.mxu0 0.0
        %665 = vmatpush1.msra.mxu0 0.0
        %666 = vmatprep.subr.mxu0 0.0
        %667 = vmatpush1.msra.mxu0 0.0
        %668 = vmatprep.subr.mxu0 0.0
        %669 = vmatpush1.msra.mxu0 0.0
        %670 = vmatprep.subr.mxu0 0.0
        %671 = vmatpush1.msra.mxu0 0.0
        %672 = vmatprep.subr.mxu0 0.0
        %673 = vmatpush1.msra.mxu0 0.0
        %674 = vmatprep.subr.mxu0 0.0
        %675 = vmatpush1.msra.mxu0 0.0
        %676 = vmatprep.subr.mxu0 0.0
        %677 = vmatpush1.msra.mxu0 0.0
        %678 = vmatprep.subr.mxu0 0.0
        %679 = vmatpush1.msra.mxu0 0.0
        %680 = vmatprep.subr.mxu0 0.0
        %681 = vmatpush1.msra.mxu0 0.0
        %682 = vmatprep.subr.mxu0 0.0
        %683 = vmatpush1.msra.mxu0 0.0
        %684 = vmatprep.subr.mxu0 0.0
        %685 = vmatpush1.msra.mxu0 0.0
        %686 = vmatprep.subr.mxu0 0.0
        %687 = vmatpush1.msra.mxu0 0.0
        %688 = vmatprep.subr.mxu0 0.0
        %689 = vmatpush1.msra.mxu0 0.0
        %690 = vmatprep.subr.mxu0 0.0
        %691 = vmatpush1.msra.mxu0 0.0
        %692 = vmatprep.subr.mxu0 0.0
        %693 = vmatpush1.msra.mxu0 0.0
        %694 = vmatprep.subr.mxu0 0.0
        %695 = vmatpush1.msra.mxu0 0.0
        %696 = vmatprep.subr.mxu0 0.0
        %697 = vmatpush1.msra.mxu0 0.0
        %698 = vmatprep.subr.mxu0 0.0
        %699 = vmatpush1.msra.mxu0 0.0
        %700 = vmatprep.subr.mxu0 0.0
        %701 = vmatpush1.msra.mxu0 0.0
        %702 = vmatprep.subr.mxu0 0.0
        %703 = vmatpush1.msra.mxu0 0.0
        %704 = vmatprep.subr.mxu0 0.0
        %705 = vmatpush1.msra.mxu0 0.0
        %706 = vmatprep.subr.mxu0 0.0
        %707 = vmatpush1.msra.mxu0 0.0
        %708 = vmatprep.mubr.f32.mxu0 0.0
        %709 = vmatmul.mubr.f32.gmra.mrb[0].mxu0 %v642
        %v710 = vpop.f32.mrb[0].mxu0
        %v711 = vadd.f32 %v639, %v710
        %v712 = vpop.f32.mrb[0].mxu0
        %713 = vdwg.mxu0
        %714 = vst [vmem:[%s377] sm:$0xff] %v711
        %s715 = sand.u32 %s269, 1
        %s716 = scalar_lea.sflag [#allocation3], %s715
        %s717 = sand.u32 %s269, 1
        %s718 = smul.addr %s717, 8
        %s719 = scalar_lea.vmem [#allocation2], %s718
        // Predicated region
        $region65: #{tpu_custom_call.1} parent=63 // pred_check
          %p720 = pneg %p279
        $region66: #{tpu_custom_call.1} parent=63 // pred_check_branch
          %722 = sbr.rel (%p720) target = $region68
        $region67: #{tpu_custom_call.1} parent=63 // pred_region
          %s724 = ssub.s32 128, 128
          %725 = vsyncadd %s716, %s724
          %s726 = smul.addr %s25, 128
          %s727 = scalar_lea.hbm %s11, %s726
          %s729 = sshll.u32 %s719, 4
          %s730 = int_to_ptr.vmem [resolvable:$true] %s729
          %732 = dma.vmem_to_hbm [thread:$0]  %s730, 128, %s727, %s716
        $region68: #{tpu_custom_call.1} parent=63 // pred_fallthru
          _
      $region64: #{tpu_custom_call.1} parent=5 // pred_fallthru
        _
      %p733 = scmp.le.s32.totalorder 2, %s20
      // Predicated region
      $region69: #{tpu_custom_call.1} parent=5 // pred_check
        %p734 = pneg %p733
      $region70: #{tpu_custom_call.1} parent=5 // pred_check_branch
        %736 = sbr.rel (%p734) target = $region72
      $region71: #{tpu_custom_call.1} parent=5 // pred_region
        %s737 = ssub.s32 %s20, 2
        // Predicated region
        $region73: #{tpu_custom_call.1} parent=71 // pred_check
          %p738 = pneg %p285
        $region74: #{tpu_custom_call.1} parent=71 // pred_check_branch
          %740 = sbr.rel (%p738) target = $region76
        $region75: #{tpu_custom_call.1} parent=71 // pred_region
          %s741 = sand.u32 %s270, 1
          %s742 = scalar_lea.sflag [#allocation3], %s741
          %s743 = sand.u32 %s270, 1
          %s744 = smul.addr %s743, 8
          %s745 = scalar_lea.vmem [#allocation2], %s744
          %746 = dma.done %s742, 128
        $region76: #{tpu_custom_call.1} parent=71 // pred_fallthru
          _
      $region72: #{tpu_custom_call.1} parent=5 // pred_fallthru
        _
    $region6: #{tpu_custom_call.1} parent=1 // loop_footer
      %s24 = sadd.s32 1, %s20
    $region7: #{tpu_custom_call.1} parent=1 // loop_footer_branch
      %19 = sbr.rel target = $region3
    $region8: #{tpu_custom_call.1} parent=1 // loop_exit
      _
    %747 = vsyncpa [#allocation3], 1
    %s748 = scalar_lea.sflag [#allocation3], 1
    %749 = vsyncpa %s748, 1

</llo_original>
